<compile_context>
chip_gen: v7x
topology: tpu7x:2x2x1
jax: 0.10.0
libtpu: 0.0.40
codegen_flags: <defaults>
</compile_context>

<pallas_src>
import jax
import jax.numpy as jnp
import numpy as np
from jax.experimental import pallas as pl
from jax.experimental.pallas import tpu as pltpu


# -----------------------------------------------------------------------------
# Pallas kernel
#
# Fused gate layout along the 8H axis (blocks of width H):
#   [ i_f, i_b, f_f, f_b, o_f, o_b, g_f, g_b ]
# Recurrent state h, c are (B, 2H) with columns [forward | backward].
# -----------------------------------------------------------------------------
def bilstm_kernel(x_ref,      # (T, B, 2D)  lanes: [x_t | x_{T-1-t}]
                  wih_ref,    # (2D, 8H)    block-structured input weights
                  whh_ref,    # (2H, 8H)    block-diagonal recurrent weights
                  b_ref,      # (1, 8H)     b_ih + b_hh, both directions
                  wfc_ref,    # (2H, O)     FC weight, rows permuted to [fwd|bwd]
                  bfc_ref,    # (1, O)
                  out_ref,    # (B, O)
                  u_scr):     # VMEM scratch (T, B, 8H): hoisted input projections
    T, B, _ = x_ref.shape
    H2, H8 = whh_ref.shape
    H = H2 // 2
    H6 = 6 * H

    # --- hoisted, lane-dense input projection (both directions, all 4 gates) --
    # No serial dependency -> kept off the recurrent critical path.
    wih = wih_ref[...]
    bias = jnp.broadcast_to(b_ref[...], (B, H8))   # broadcast hoisted out of loops

    def proj(t, carry):
        u_scr[t] = (jnp.dot(x_ref[t], wih, preferred_element_type=jnp.float32)
                    + bias)
        return carry

    jax.lax.fori_loop(0, T, proj, 0, unroll=True)

    # --- recurrent loop: one fused (B,2H)@(2H,8H) MXU push per timestep -------
    whh = whh_ref[...]                              # small; held in vregs
    h0 = jnp.zeros((B, H2), jnp.float32)
    c0 = jnp.zeros((B, H2), jnp.float32)

    def step(t, carry):
        h, c = carry
        gates = u_scr[t] + jnp.dot(h, whh, preferred_element_type=jnp.float32)  # (B, 8H)
        s = jax.nn.sigmoid(gates[:, :H6])           # [i_f,i_b,f_f,f_b,o_f,o_b] one EUP slab
        g = jnp.tanh(gates[:, H6:])                 # [g_f, g_b]
        i_g = s[:, :H2]
        f_g = s[:, H2:2 * H2]
        o_g = s[:, 2 * H2:]
        c_new = f_g * c + i_g * g
        h_new = o_g * jnp.tanh(c_new)
        return h_new, c_new

    h, _ = jax.lax.fori_loop(0, T, step, (h0, c0), unroll=True)

    # --- FC + sigmoid (wfc rows pre-permuted; no lane-axis concat needed) -----
    logits = (jnp.dot(h, wfc_ref[...], preferred_element_type=jnp.float32)
              + bfc_ref[...])
    out_ref[...] = jax.nn.sigmoid(logits).astype(out_ref.dtype)


# -----------------------------------------------------------------------------
# Wrapper: pack PyTorch-layout per-gate params into the fused kernel layouts
# (plain XLA; trivially cheap and not on the recurrent critical path).
# -----------------------------------------------------------------------------
def _pack_params(params, H):
    (wih_f, whh_f, b_f, wih_b, whh_b, b_b, wfc, bfc) = params
    D = wih_f.shape[1]
    zD = jnp.zeros((D, H), jnp.float32)
    zH = jnp.zeros((H, H), jnp.float32)
    # PyTorch per-gate order in params: [i, f, g, o]
    # Fused column order (width H each):  [i_f, i_b, f_f, f_b, o_f, o_b, g_f, g_b]
    wih_big = jnp.concatenate([
        jnp.concatenate([wih_f[0], zD, wih_f[1], zD, wih_f[3], zD, wih_f[2], zD], axis=1),
        jnp.concatenate([zD, wih_b[0], zD, wih_b[1], zD, wih_b[3], zD, wih_b[2]], axis=1),
    ], axis=0)                                                   # (2D, 8H)
    whh_big = jnp.concatenate([
        jnp.concatenate([whh_f[0], zH, whh_f[1], zH, whh_f[3], zH, whh_f[2], zH], axis=1),
        jnp.concatenate([zH, whh_b[0], zH, whh_b[1], zH, whh_b[3], zH, whh_b[2]], axis=1),
    ], axis=0)                                                   # (2H, 8H) block-diag
    b_big = jnp.concatenate(
        [b_f[0], b_b[0], b_f[1], b_b[1], b_f[3], b_b[3], b_f[2], b_b[2]], axis=1)  # (1, 8H)
    # torch.cat((h_bwd, h_fwd)) @ wfc  ==  h_fwd @ wfc[H:] + h_bwd @ wfc[:H]
    wfc_r = jnp.concatenate([wfc[H:], wfc[:H]], axis=0)          # (2H, O) for [fwd|bwd] state
    return wih_big, whh_big, b_big, wfc_r, bfc


@jax.jit
def simple_lstm_forward(x, params):
    """x: (B, T, D) float32. Returns (B,) — matches out.squeeze(1) for output_dim=1."""
    whh_f = params[1]
    H = whh_f.shape[1]
    B, T, D = x.shape
    wih_big, whh_big, b_big, wfc_r, bfc = _pack_params(params, H)
    O = wfc_r.shape[1]

    # Time-major; stack the reversed sequence along lanes so the backward
    # direction reads x[T-1-t] from the same row the forward direction reads x[t].
    x_tbd = jnp.transpose(x, (1, 0, 2))                          # (T, B, D)
    x_pair = jnp.concatenate([x_tbd, x_tbd[::-1]], axis=-1)      # (T, B, 2D)

    # TODO(synk): for large T/B/H (esp. v7x 64 MiB VMEM), add a grid over batch
    # (dimension_semantics=("parallel",)) and/or chunk T instead of keeping the
    # full sequence VMEM-resident; unnecessary at these toy shapes.
    vmem = pl.BlockSpec(memory_space=pltpu.MemorySpace.VMEM)
    out = pl.pallas_call(
        bilstm_kernel,
        out_shape=jax.ShapeDtypeStruct((B, O), jnp.float32),
        in_specs=[vmem] * 6,
        out_specs=vmem,
        scratch_shapes=[pltpu.VMEM((T, B, 8 * H), jnp.float32)],
    )(x_pair, wih_big, whh_big, b_big, wfc_r, bfc)

    # nn.Dropout: identity in eval mode; out.squeeze(1) with output_dim == 1.
    return out[:, 0]


# -----------------------------------------------------------------------------
# Pure-JAX reference (for correctness check) — PyTorch-layout params.
# -----------------------------------------------------------------------------
def simple_lstm_ref(x, params):
    (wih_f, whh_f, b_f, wih_b, whh_b, b_b, wfc, bfc) = params
    B, T, D = x.shape
    H = whh_f.shape[1]
    x_tbd = jnp.transpose(x, (1, 0, 2))

    def cell(x_t, h, c, wih, whh, b):
        def gate(k):
            return x_t @ wih[k] + h @ whh[k] + b[k]
        i = jax.nn.sigmoid(gate(0))
        f = jax.nn.sigmoid(gate(1))
        g = jnp.tanh(gate(2))
        o = jax.nn.sigmoid(gate(3))
        c_new = f * c + i * g
        return o * jnp.tanh(c_new), c_new

    def run_dir(xs, wih, whh, b):
        def step(carry, x_t):
            h, c = carry
            h, c = cell(x_t, h, c, wih, whh, b)
            return (h, c), None
        (h, _), _ = jax.lax.scan(
            step, (jnp.zeros((B, H), jnp.float32), jnp.zeros((B, H), jnp.float32)), xs)
        return h

    hf = run_dir(x_tbd, wih_f, whh_f, b_f)
    hb = run_dir(x_tbd[::-1], wih_b, whh_b, b_b)
    h_cat = jnp.concatenate([hb, hf], axis=-1)
    out = jax.nn.sigmoid(h_cat @ wfc + bfc)
    return out[:, 0]


# -----------------------------------------------------------------------------
# Deterministic parameter init (PyTorch-style uniform(-1/sqrt(H), 1/sqrt(H)))
# Gate order in params follows PyTorch: [i, f, g, o].
# -----------------------------------------------------------------------------
def init_params(key, input_dim, hidden_dim, output_dim):
    D, H, O = input_dim, hidden_dim, output_dim
    k = 1.0 / np.sqrt(H)
    keys = jax.random.split(key, 10)

    def u(rk, shape):
        return jax.random.uniform(rk, shape, jnp.float32, -k, k)

    wih_f = u(keys[0], (4, D, H))
    whh_f = u(keys[1], (4, H, H))
    b_f = u(keys[2], (4, 1, H)) + u(keys[3], (4, 1, H))   # b_ih + b_hh
    wih_b = u(keys[4], (4, D, H))
    whh_b = u(keys[5], (4, H, H))
    b_b = u(keys[6], (4, 1, H)) + u(keys[7], (4, 1, H))
    kfc = 1.0 / np.sqrt(2 * H)
    wfc = jax.random.uniform(keys[8], (2 * H, O), jnp.float32, -kfc, kfc)
    bfc = jax.random.uniform(keys[9], (1, O), jnp.float32, -kfc, kfc)
    return (wih_f, whh_f, b_f, wih_b, whh_b, b_b, wfc, bfc)


if __name__ == "__main__":
    # Shapes implied by the module: bidirectional=True, num_layers=1,
    # output_dim=1 (forward calls out.squeeze(1)).
    batch, seq, input_dim, hidden_dim, output_dim = 2, 8, 16, 32, 1

    key = jax.random.PRNGKey(0)
    kx, kp = jax.random.split(key)
    x = jax.random.normal(kx, (batch, seq, input_dim), jnp.float32)
    params = init_params(kp, input_dim, hidden_dim, output_dim)

    out = simple_lstm_forward(x, params)
    out = jax.block_until_ready(out)

    ref = jax.block_until_ready(simple_lstm_ref(x, params))
    assert out.shape == (batch,), out.shape
    np.testing.assert_allclose(np.asarray(out), np.asarray(ref), rtol=1e-5, atol=1e-5)

    print("KERNEL_OK")
</pallas_src>

<mosaic_0001>
module attributes {stable_mosaic.version = 11 : i64} {
  func.func @bilstm_kernel(%arg0: memref<8x2x32xf32, #tpu.memory_space<vmem>>, %arg1: memref<32x256xf32, #tpu.memory_space<vmem>>, %arg2: memref<64x256xf32, #tpu.memory_space<vmem>>, %arg3: memref<1x256xf32, #tpu.memory_space<vmem>>, %arg4: memref<64x1xf32, #tpu.memory_space<vmem>>, %arg5: memref<1x1xf32, #tpu.memory_space<vmem>>, %arg6: memref<2x1xf32, #tpu.memory_space<vmem>>, %arg7: memref<8x2x256xf32, #tpu.memory_space<vmem>>) attributes {dimension_semantics = [], scalar_prefetch = 0 : i64, scratch_operands = 1 : i64, tpu.core_type = #tpu.core_type<tc>} {
    %c0 = arith.constant 0 : index
    %c0_0 = arith.constant 0 : index
    %0 = vector.load %arg1[%c0, %c0_0] : memref<32x256xf32, #tpu.memory_space<vmem>>, vector<32x256xf32>
    %c0_1 = arith.constant 0 : index
    %c0_2 = arith.constant 0 : index
    %1 = vector.load %arg3[%c0_1, %c0_2] : memref<1x256xf32, #tpu.memory_space<vmem>>, vector<1x256xf32>
    %2 = vector.shape_cast %1 : vector<1x256xf32> to vector<1x256xf32>
    %3 = vector.broadcast %2 : vector<1x256xf32> to vector<2x256xf32>
    %c0_i32 = arith.constant 0 : i32
    %4 = arith.index_cast %c0_i32 : i32 to index
    %c0_3 = arith.constant 0 : index
    %c0_4 = arith.constant 0 : index
    %5 = vector.load %arg0[%4, %c0_3, %c0_4] : memref<8x2x32xf32, #tpu.memory_space<vmem>>, vector<1x2x32xf32>
    %6 = vector.shape_cast %5 : vector<1x2x32xf32> to vector<2x32xf32>
    %cst = arith.constant dense<0.000000e+00> : vector<2x256xf32>
    %7 = tpu.matmul %6, %0, %cst {dimension_numbers = #tpu.dot_dimension_numbers<[1], [0], [0], [1], [0, 0, 1, 1], [], []>} : vector<2x32xf32>, vector<32x256xf32>, vector<2x256xf32> -> vector<2x256xf32>
    %8 = arith.addf %7, %3 : vector<2x256xf32>
    %9 = arith.index_cast %c0_i32 : i32 to index
    %c0_5 = arith.constant 0 : index
    %c0_6 = arith.constant 0 : index
    %10 = vector.load %arg7[%9, %c0_5, %c0_6] : memref<8x2x256xf32, #tpu.memory_space<vmem>>, vector<1x2x256xf32>
    %11 = vector.shape_cast %10 : vector<1x2x256xf32> to vector<2x256xf32>
    %12 = vector.shape_cast %8 : vector<2x256xf32> to vector<1x2x256xf32>
    tpu.vector_store %arg7[%9, %c0_5, %c0_6], %12 {strides = array<i32>} : memref<8x2x256xf32, #tpu.memory_space<vmem>>, vector<1x2x256xf32>,
    %c1_i32 = arith.constant 1 : i32
    %13 = arith.index_cast %c1_i32 : i32 to index
    %c0_7 = arith.constant 0 : index
    %c0_8 = arith.constant 0 : index
    %14 = vector.load %arg0[%13, %c0_7, %c0_8] : memref<8x2x32xf32, #tpu.memory_space<vmem>>, vector<1x2x32xf32>
    %15 = vector.shape_cast %14 : vector<1x2x32xf32> to vector<2x32xf32>
    %cst_9 = arith.constant dense<0.000000e+00> : vector<2x256xf32>
    %16 = tpu.matmul %15, %0, %cst_9 {dimension_numbers = #tpu.dot_dimension_numbers<[1], [0], [0], [1], [0, 0, 1, 1], [], []>} : vector<2x32xf32>, vector<32x256xf32>, vector<2x256xf32> -> vector<2x256xf32>
    %17 = arith.addf %16, %3 : vector<2x256xf32>
    %18 = arith.index_cast %c1_i32 : i32 to index
    %c0_10 = arith.constant 0 : index
    %c0_11 = arith.constant 0 : index
    %19 = vector.load %arg7[%18, %c0_10, %c0_11] : memref<8x2x256xf32, #tpu.memory_space<vmem>>, vector<1x2x256xf32>
    %20 = vector.shape_cast %19 : vector<1x2x256xf32> to vector<2x256xf32>
    %21 = vector.shape_cast %17 : vector<2x256xf32> to vector<1x2x256xf32>
    tpu.vector_store %arg7[%18, %c0_10, %c0_11], %21 {strides = array<i32>} : memref<8x2x256xf32, #tpu.memory_space<vmem>>, vector<1x2x256xf32>,
    %c2_i32 = arith.constant 2 : i32
    %22 = arith.index_cast %c2_i32 : i32 to index
    %c0_12 = arith.constant 0 : index
    %c0_13 = arith.constant 0 : index
    %23 = vector.load %arg0[%22, %c0_12, %c0_13] : memref<8x2x32xf32, #tpu.memory_space<vmem>>, vector<1x2x32xf32>
    %24 = vector.shape_cast %23 : vector<1x2x32xf32> to vector<2x32xf32>
    %cst_14 = arith.constant dense<0.000000e+00> : vector<2x256xf32>
    %25 = tpu.matmul %24, %0, %cst_14 {dimension_numbers = #tpu.dot_dimension_numbers<[1], [0], [0], [1], [0, 0, 1, 1], [], []>} : vector<2x32xf32>, vector<32x256xf32>, vector<2x256xf32> -> vector<2x256xf32>
    %26 = arith.addf %25, %3 : vector<2x256xf32>
    %27 = arith.index_cast %c2_i32 : i32 to index
    %c0_15 = arith.constant 0 : index
    %c0_16 = arith.constant 0 : index
    %28 = vector.load %arg7[%27, %c0_15, %c0_16] : memref<8x2x256xf32, #tpu.memory_space<vmem>>, vector<1x2x256xf32>
    %29 = vector.shape_cast %28 : vector<1x2x256xf32> to vector<2x256xf32>
    %30 = vector.shape_cast %26 : vector<2x256xf32> to vector<1x2x256xf32>
    tpu.vector_store %arg7[%27, %c0_15, %c0_16], %30 {strides = array<i32>} : memref<8x2x256xf32, #tpu.memory_space<vmem>>, vector<1x2x256xf32>,
    %c3_i32 = arith.constant 3 : i32
    %31 = arith.index_cast %c3_i32 : i32 to index
    %c0_17 = arith.constant 0 : index
    %c0_18 = arith.constant 0 : index
    %32 = vector.load %arg0[%31, %c0_17, %c0_18] : memref<8x2x32xf32, #tpu.memory_space<vmem>>, vector<1x2x32xf32>
    %33 = vector.shape_cast %32 : vector<1x2x32xf32> to vector<2x32xf32>
    %cst_19 = arith.constant dense<0.000000e+00> : vector<2x256xf32>
    %34 = tpu.matmul %33, %0, %cst_19 {dimension_numbers = #tpu.dot_dimension_numbers<[1], [0], [0], [1], [0, 0, 1, 1], [], []>} : vector<2x32xf32>, vector<32x256xf32>, vector<2x256xf32> -> vector<2x256xf32>
    %35 = arith.addf %34, %3 : vector<2x256xf32>
    %36 = arith.index_cast %c3_i32 : i32 to index
    %c0_20 = arith.constant 0 : index
    %c0_21 = arith.constant 0 : index
    %37 = vector.load %arg7[%36, %c0_20, %c0_21] : memref<8x2x256xf32, #tpu.memory_space<vmem>>, vector<1x2x256xf32>
    %38 = vector.shape_cast %37 : vector<1x2x256xf32> to vector<2x256xf32>
    %39 = vector.shape_cast %35 : vector<2x256xf32> to vector<1x2x256xf32>
    tpu.vector_store %arg7[%36, %c0_20, %c0_21], %39 {strides = array<i32>} : memref<8x2x256xf32, #tpu.memory_space<vmem>>, vector<1x2x256xf32>,
    %c4_i32 = arith.constant 4 : i32
    %40 = arith.index_cast %c4_i32 : i32 to index
    %c0_22 = arith.constant 0 : index
    %c0_23 = arith.constant 0 : index
    %41 = vector.load %arg0[%40, %c0_22, %c0_23] : memref<8x2x32xf32, #tpu.memory_space<vmem>>, vector<1x2x32xf32>
    %42 = vector.shape_cast %41 : vector<1x2x32xf32> to vector<2x32xf32>
    %cst_24 = arith.constant dense<0.000000e+00> : vector<2x256xf32>
    %43 = tpu.matmul %42, %0, %cst_24 {dimension_numbers = #tpu.dot_dimension_numbers<[1], [0], [0], [1], [0, 0, 1, 1], [], []>} : vector<2x32xf32>, vector<32x256xf32>, vector<2x256xf32> -> vector<2x256xf32>
    %44 = arith.addf %43, %3 : vector<2x256xf32>
    %45 = arith.index_cast %c4_i32 : i32 to index
    %c0_25 = arith.constant 0 : index
    %c0_26 = arith.constant 0 : index
    %46 = vector.load %arg7[%45, %c0_25, %c0_26] : memref<8x2x256xf32, #tpu.memory_space<vmem>>, vector<1x2x256xf32>
    %47 = vector.shape_cast %46 : vector<1x2x256xf32> to vector<2x256xf32>
    %48 = vector.shape_cast %44 : vector<2x256xf32> to vector<1x2x256xf32>
    tpu.vector_store %arg7[%45, %c0_25, %c0_26], %48 {strides = array<i32>} : memref<8x2x256xf32, #tpu.memory_space<vmem>>, vector<1x2x256xf32>,
    %c5_i32 = arith.constant 5 : i32
    %49 = arith.index_cast %c5_i32 : i32 to index
    %c0_27 = arith.constant 0 : index
    %c0_28 = arith.constant 0 : index
    %50 = vector.load %arg0[%49, %c0_27, %c0_28] : memref<8x2x32xf32, #tpu.memory_space<vmem>>, vector<1x2x32xf32>
    %51 = vector.shape_cast %50 : vector<1x2x32xf32> to vector<2x32xf32>
    %cst_29 = arith.constant dense<0.000000e+00> : vector<2x256xf32>
    %52 = tpu.matmul %51, %0, %cst_29 {dimension_numbers = #tpu.dot_dimension_numbers<[1], [0], [0], [1], [0, 0, 1, 1], [], []>} : vector<2x32xf32>, vector<32x256xf32>, vector<2x256xf32> -> vector<2x256xf32>
    %53 = arith.addf %52, %3 : vector<2x256xf32>
    %54 = arith.index_cast %c5_i32 : i32 to index
    %c0_30 = arith.constant 0 : index
    %c0_31 = arith.constant 0 : index
    %55 = vector.load %arg7[%54, %c0_30, %c0_31] : memref<8x2x256xf32, #tpu.memory_space<vmem>>, vector<1x2x256xf32>
    %56 = vector.shape_cast %55 : vector<1x2x256xf32> to vector<2x256xf32>
    %57 = vector.shape_cast %53 : vector<2x256xf32> to vector<1x2x256xf32>
    tpu.vector_store %arg7[%54, %c0_30, %c0_31], %57 {strides = array<i32>} : memref<8x2x256xf32, #tpu.memory_space<vmem>>, vector<1x2x256xf32>,
    %c6_i32 = arith.constant 6 : i32
    %58 = arith.index_cast %c6_i32 : i32 to index
    %c0_32 = arith.constant 0 : index
    %c0_33 = arith.constant 0 : index
    %59 = vector.load %arg0[%58, %c0_32, %c0_33] : memref<8x2x32xf32, #tpu.memory_space<vmem>>, vector<1x2x32xf32>
    %60 = vector.shape_cast %59 : vector<1x2x32xf32> to vector<2x32xf32>
    %cst_34 = arith.constant dense<0.000000e+00> : vector<2x256xf32>
    %61 = tpu.matmul %60, %0, %cst_34 {dimension_numbers = #tpu.dot_dimension_numbers<[1], [0], [0], [1], [0, 0, 1, 1], [], []>} : vector<2x32xf32>, vector<32x256xf32>, vector<2x256xf32> -> vector<2x256xf32>
    %62 = arith.addf %61, %3 : vector<2x256xf32>
    %63 = arith.index_cast %c6_i32 : i32 to index
    %c0_35 = arith.constant 0 : index
    %c0_36 = arith.constant 0 : index
    %64 = vector.load %arg7[%63, %c0_35, %c0_36] : memref<8x2x256xf32, #tpu.memory_space<vmem>>, vector<1x2x256xf32>
    %65 = vector.shape_cast %64 : vector<1x2x256xf32> to vector<2x256xf32>
    %66 = vector.shape_cast %62 : vector<2x256xf32> to vector<1x2x256xf32>
    tpu.vector_store %arg7[%63, %c0_35, %c0_36], %66 {strides = array<i32>} : memref<8x2x256xf32, #tpu.memory_space<vmem>>, vector<1x2x256xf32>,
    %c7_i32 = arith.constant 7 : i32
    %67 = arith.index_cast %c7_i32 : i32 to index
    %c0_37 = arith.constant 0 : index
    %c0_38 = arith.constant 0 : index
    %68 = vector.load %arg0[%67, %c0_37, %c0_38] : memref<8x2x32xf32, #tpu.memory_space<vmem>>, vector<1x2x32xf32>
    %69 = vector.shape_cast %68 : vector<1x2x32xf32> to vector<2x32xf32>
    %cst_39 = arith.constant dense<0.000000e+00> : vector<2x256xf32>
    %70 = tpu.matmul %69, %0, %cst_39 {dimension_numbers = #tpu.dot_dimension_numbers<[1], [0], [0], [1], [0, 0, 1, 1], [], []>} : vector<2x32xf32>, vector<32x256xf32>, vector<2x256xf32> -> vector<2x256xf32>
    %71 = arith.addf %70, %3 : vector<2x256xf32>
    %72 = arith.index_cast %c7_i32 : i32 to index
    %c0_40 = arith.constant 0 : index
    %c0_41 = arith.constant 0 : index
    %73 = vector.load %arg7[%72, %c0_40, %c0_41] : memref<8x2x256xf32, #tpu.memory_space<vmem>>, vector<1x2x256xf32>
    %74 = vector.shape_cast %73 : vector<1x2x256xf32> to vector<2x256xf32>
    %75 = vector.shape_cast %71 : vector<2x256xf32> to vector<1x2x256xf32>
    tpu.vector_store %arg7[%72, %c0_40, %c0_41], %75 {strides = array<i32>} : memref<8x2x256xf32, #tpu.memory_space<vmem>>, vector<1x2x256xf32>,
    %c8_i32 = arith.constant 8 : i32
    %c0_42 = arith.constant 0 : index
    %c0_43 = arith.constant 0 : index
    %76 = vector.load %arg2[%c0_42, %c0_43] : memref<64x256xf32, #tpu.memory_space<vmem>>, vector<64x256xf32>
    %cst_44 = arith.constant 0.000000e+00 : f32
    %77 = vector.broadcast %cst_44 : f32 to vector<2x64xf32>
    %cst_45 = arith.constant 0.000000e+00 : f32
    %78 = vector.broadcast %cst_45 : f32 to vector<2x64xf32>
    %c0_i32_46 = arith.constant 0 : i32
    %79 = arith.index_cast %c0_i32_46 : i32 to index
    %c0_47 = arith.constant 0 : index
    %c0_48 = arith.constant 0 : index
    %80 = vector.load %arg7[%79, %c0_47, %c0_48] : memref<8x2x256xf32, #tpu.memory_space<vmem>>, vector<1x2x256xf32>
    %81 = vector.shape_cast %80 : vector<1x2x256xf32> to vector<2x256xf32>
    %cst_49 = arith.constant dense<0.000000e+00> : vector<2x256xf32>
    %82 = tpu.matmul %77, %76, %cst_49 {dimension_numbers = #tpu.dot_dimension_numbers<[1], [0], [0], [1], [0, 0, 1, 1], [], []>} : vector<2x64xf32>, vector<64x256xf32>, vector<2x256xf32> -> vector<2x256xf32>
    %83 = arith.addf %81, %82 : vector<2x256xf32>
    %84 = vector.extract_strided_slice %83 {offsets = [0, 0], sizes = [2, 192], strides = [1, 1]} : vector<2x256xf32> to vector<2x192xf32>
    %85 = arith.negf %84 : vector<2x192xf32>
    %86 = math.exp %85 : vector<2x192xf32>
    %cst_50 = arith.constant 1.000000e+00 : f32
    %87 = vector.broadcast %cst_50 : f32 to vector<2x192xf32>
    %88 = arith.addf %87, %86 : vector<2x192xf32>
    %89 = arith.divf %87, %88 : vector<2x192xf32>
    %90 = vector.extract_strided_slice %83 {offsets = [0, 192], sizes = [2, 64], strides = [1, 1]} : vector<2x256xf32> to vector<2x64xf32>
    %91 = math.tanh %90 : vector<2x64xf32>
    %92 = vector.extract_strided_slice %89 {offsets = [0, 0], sizes = [2, 64], strides = [1, 1]} : vector<2x192xf32> to vector<2x64xf32>
    %93 = vector.extract_strided_slice %89 {offsets = [0, 64], sizes = [2, 64], strides = [1, 1]} : vector<2x192xf32> to vector<2x64xf32>
    %94 = vector.extract_strided_slice %89 {offsets = [0, 128], sizes = [2, 64], strides = [1, 1]} : vector<2x192xf32> to vector<2x64xf32>
    %95 = arith.mulf %93, %78 : vector<2x64xf32>
    %96 = arith.mulf %92, %91 : vector<2x64xf32>
    %97 = arith.addf %95, %96 : vector<2x64xf32>
    %98 = math.tanh %97 : vector<2x64xf32>
    %99 = arith.mulf %94, %98 : vector<2x64xf32>
    %c1_i32_51 = arith.constant 1 : i32
    %100 = arith.index_cast %c1_i32_51 : i32 to index
    %c0_52 = arith.constant 0 : index
    %c0_53 = arith.constant 0 : index
    %101 = vector.load %arg7[%100, %c0_52, %c0_53] : memref<8x2x256xf32, #tpu.memory_space<vmem>>, vector<1x2x256xf32>
    %102 = vector.shape_cast %101 : vector<1x2x256xf32> to vector<2x256xf32>
    %cst_54 = arith.constant dense<0.000000e+00> : vector<2x256xf32>
    %103 = tpu.matmul %99, %76, %cst_54 {dimension_numbers = #tpu.dot_dimension_numbers<[1], [0], [0], [1], [0, 0, 1, 1], [], []>} : vector<2x64xf32>, vector<64x256xf32>, vector<2x256xf32> -> vector<2x256xf32>
    %104 = arith.addf %102, %103 : vector<2x256xf32>
    %105 = vector.extract_strided_slice %104 {offsets = [0, 0], sizes = [2, 192], strides = [1, 1]} : vector<2x256xf32> to vector<2x192xf32>
    %106 = arith.negf %105 : vector<2x192xf32>
    %107 = math.exp %106 : vector<2x192xf32>
    %cst_55 = arith.constant 1.000000e+00 : f32
    %108 = vector.broadcast %cst_55 : f32 to vector<2x192xf32>
    %109 = arith.addf %108, %107 : vector<2x192xf32>
    %110 = arith.divf %108, %109 : vector<2x192xf32>
    %111 = vector.extract_strided_slice %104 {offsets = [0, 192], sizes = [2, 64], strides = [1, 1]} : vector<2x256xf32> to vector<2x64xf32>
    %112 = math.tanh %111 : vector<2x64xf32>
    %113 = vector.extract_strided_slice %110 {offsets = [0, 0], sizes = [2, 64], strides = [1, 1]} : vector<2x192xf32> to vector<2x64xf32>
    %114 = vector.extract_strided_slice %110 {offsets = [0, 64], sizes = [2, 64], strides = [1, 1]} : vector<2x192xf32> to vector<2x64xf32>
    %115 = vector.extract_strided_slice %110 {offsets = [0, 128], sizes = [2, 64], strides = [1, 1]} : vector<2x192xf32> to vector<2x64xf32>
    %116 = arith.mulf %114, %97 : vector<2x64xf32>
    %117 = arith.mulf %113, %112 : vector<2x64xf32>
    %118 = arith.addf %116, %117 : vector<2x64xf32>
    %119 = math.tanh %118 : vector<2x64xf32>
    %120 = arith.mulf %115, %119 : vector<2x64xf32>
    %c2_i32_56 = arith.constant 2 : i32
    %121 = arith.index_cast %c2_i32_56 : i32 to index
    %c0_57 = arith.constant 0 : index
    %c0_58 = arith.constant 0 : index
    %122 = vector.load %arg7[%121, %c0_57, %c0_58] : memref<8x2x256xf32, #tpu.memory_space<vmem>>, vector<1x2x256xf32>
    %123 = vector.shape_cast %122 : vector<1x2x256xf32> to vector<2x256xf32>
    %cst_59 = arith.constant dense<0.000000e+00> : vector<2x256xf32>
    %124 = tpu.matmul %120, %76, %cst_59 {dimension_numbers = #tpu.dot_dimension_numbers<[1], [0], [0], [1], [0, 0, 1, 1], [], []>} : vector<2x64xf32>, vector<64x256xf32>, vector<2x256xf32> -> vector<2x256xf32>
    %125 = arith.addf %123, %124 : vector<2x256xf32>
    %126 = vector.extract_strided_slice %125 {offsets = [0, 0], sizes = [2, 192], strides = [1, 1]} : vector<2x256xf32> to vector<2x192xf32>
    %127 = arith.negf %126 : vector<2x192xf32>
    %128 = math.exp %127 : vector<2x192xf32>
    %cst_60 = arith.constant 1.000000e+00 : f32
    %129 = vector.broadcast %cst_60 : f32 to vector<2x192xf32>
    %130 = arith.addf %129, %128 : vector<2x192xf32>
    %131 = arith.divf %129, %130 : vector<2x192xf32>
    %132 = vector.extract_strided_slice %125 {offsets = [0, 192], sizes = [2, 64], strides = [1, 1]} : vector<2x256xf32> to vector<2x64xf32>
    %133 = math.tanh %132 : vector<2x64xf32>
    %134 = vector.extract_strided_slice %131 {offsets = [0, 0], sizes = [2, 64], strides = [1, 1]} : vector<2x192xf32> to vector<2x64xf32>
    %135 = vector.extract_strided_slice %131 {offsets = [0, 64], sizes = [2, 64], strides = [1, 1]} : vector<2x192xf32> to vector<2x64xf32>
    %136 = vector.extract_strided_slice %131 {offsets = [0, 128], sizes = [2, 64], strides = [1, 1]} : vector<2x192xf32> to vector<2x64xf32>
    %137 = arith.mulf %135, %118 : vector<2x64xf32>
    %138 = arith.mulf %134, %133 : vector<2x64xf32>
    %139 = arith.addf %137, %138 : vector<2x64xf32>
    %140 = math.tanh %139 : vector<2x64xf32>
    %141 = arith.mulf %136, %140 : vector<2x64xf32>
    %c3_i32_61 = arith.constant 3 : i32
    %142 = arith.index_cast %c3_i32_61 : i32 to index
    %c0_62 = arith.constant 0 : index
    %c0_63 = arith.constant 0 : index
    %143 = vector.load %arg7[%142, %c0_62, %c0_63] : memref<8x2x256xf32, #tpu.memory_space<vmem>>, vector<1x2x256xf32>
    %144 = vector.shape_cast %143 : vector<1x2x256xf32> to vector<2x256xf32>
    %cst_64 = arith.constant dense<0.000000e+00> : vector<2x256xf32>
    %145 = tpu.matmul %141, %76, %cst_64 {dimension_numbers = #tpu.dot_dimension_numbers<[1], [0], [0], [1], [0, 0, 1, 1], [], []>} : vector<2x64xf32>, vector<64x256xf32>, vector<2x256xf32> -> vector<2x256xf32>
    %146 = arith.addf %144, %145 : vector<2x256xf32>
    %147 = vector.extract_strided_slice %146 {offsets = [0, 0], sizes = [2, 192], strides = [1, 1]} : vector<2x256xf32> to vector<2x192xf32>
    %148 = arith.negf %147 : vector<2x192xf32>
    %149 = math.exp %148 : vector<2x192xf32>
    %cst_65 = arith.constant 1.000000e+00 : f32
    %150 = vector.broadcast %cst_65 : f32 to vector<2x192xf32>
    %151 = arith.addf %150, %149 : vector<2x192xf32>
    %152 = arith.divf %150, %151 : vector<2x192xf32>
    %153 = vector.extract_strided_slice %146 {offsets = [0, 192], sizes = [2, 64], strides = [1, 1]} : vector<2x256xf32> to vector<2x64xf32>
    %154 = math.tanh %153 : vector<2x64xf32>
    %155 = vector.extract_strided_slice %152 {offsets = [0, 0], sizes = [2, 64], strides = [1, 1]} : vector<2x192xf32> to vector<2x64xf32>
    %156 = vector.extract_strided_slice %152 {offsets = [0, 64], sizes = [2, 64], strides = [1, 1]} : vector<2x192xf32> to vector<2x64xf32>
    %157 = vector.extract_strided_slice %152 {offsets = [0, 128], sizes = [2, 64], strides = [1, 1]} : vector<2x192xf32> to vector<2x64xf32>
    %158 = arith.mulf %156, %139 : vector<2x64xf32>
    %159 = arith.mulf %155, %154 : vector<2x64xf32>
    %160 = arith.addf %158, %159 : vector<2x64xf32>
    %161 = math.tanh %160 : vector<2x64xf32>
    %162 = arith.mulf %157, %161 : vector<2x64xf32>
    %c4_i32_66 = arith.constant 4 : i32
    %163 = arith.index_cast %c4_i32_66 : i32 to index
    %c0_67 = arith.constant 0 : index
    %c0_68 = arith.constant 0 : index
    %164 = vector.load %arg7[%163, %c0_67, %c0_68] : memref<8x2x256xf32, #tpu.memory_space<vmem>>, vector<1x2x256xf32>
    %165 = vector.shape_cast %164 : vector<1x2x256xf32> to vector<2x256xf32>
    %cst_69 = arith.constant dense<0.000000e+00> : vector<2x256xf32>
    %166 = tpu.matmul %162, %76, %cst_69 {dimension_numbers = #tpu.dot_dimension_numbers<[1], [0], [0], [1], [0, 0, 1, 1], [], []>} : vector<2x64xf32>, vector<64x256xf32>, vector<2x256xf32> -> vector<2x256xf32>
    %167 = arith.addf %165, %166 : vector<2x256xf32>
    %168 = vector.extract_strided_slice %167 {offsets = [0, 0], sizes = [2, 192], strides = [1, 1]} : vector<2x256xf32> to vector<2x192xf32>
    %169 = arith.negf %168 : vector<2x192xf32>
    %170 = math.exp %169 : vector<2x192xf32>
    %cst_70 = arith.constant 1.000000e+00 : f32
    %171 = vector.broadcast %cst_70 : f32 to vector<2x192xf32>
    %172 = arith.addf %171, %170 : vector<2x192xf32>
    %173 = arith.divf %171, %172 : vector<2x192xf32>
    %174 = vector.extract_strided_slice %167 {offsets = [0, 192], sizes = [2, 64], strides = [1, 1]} : vector<2x256xf32> to vector<2x64xf32>
    %175 = math.tanh %174 : vector<2x64xf32>
    %176 = vector.extract_strided_slice %173 {offsets = [0, 0], sizes = [2, 64], strides = [1, 1]} : vector<2x192xf32> to vector<2x64xf32>
    %177 = vector.extract_strided_slice %173 {offsets = [0, 64], sizes = [2, 64], strides = [1, 1]} : vector<2x192xf32> to vector<2x64xf32>
    %178 = vector.extract_strided_slice %173 {offsets = [0, 128], sizes = [2, 64], strides = [1, 1]} : vector<2x192xf32> to vector<2x64xf32>
    %179 = arith.mulf %177, %160 : vector<2x64xf32>
    %180 = arith.mulf %176, %175 : vector<2x64xf32>
    %181 = arith.addf %179, %180 : vector<2x64xf32>
    %182 = math.tanh %181 : vector<2x64xf32>
    %183 = arith.mulf %178, %182 : vector<2x64xf32>
    %c5_i32_71 = arith.constant 5 : i32
    %184 = arith.index_cast %c5_i32_71 : i32 to index
    %c0_72 = arith.constant 0 : index
    %c0_73 = arith.constant 0 : index
    %185 = vector.load %arg7[%184, %c0_72, %c0_73] : memref<8x2x256xf32, #tpu.memory_space<vmem>>, vector<1x2x256xf32>
    %186 = vector.shape_cast %185 : vector<1x2x256xf32> to vector<2x256xf32>
    %cst_74 = arith.constant dense<0.000000e+00> : vector<2x256xf32>
    %187 = tpu.matmul %183, %76, %cst_74 {dimension_numbers = #tpu.dot_dimension_numbers<[1], [0], [0], [1], [0, 0, 1, 1], [], []>} : vector<2x64xf32>, vector<64x256xf32>, vector<2x256xf32> -> vector<2x256xf32>
    %188 = arith.addf %186, %187 : vector<2x256xf32>
    %189 = vector.extract_strided_slice %188 {offsets = [0, 0], sizes = [2, 192], strides = [1, 1]} : vector<2x256xf32> to vector<2x192xf32>
    %190 = arith.negf %189 : vector<2x192xf32>
    %191 = math.exp %190 : vector<2x192xf32>
    %cst_75 = arith.constant 1.000000e+00 : f32
    %192 = vector.broadcast %cst_75 : f32 to vector<2x192xf32>
    %193 = arith.addf %192, %191 : vector<2x192xf32>
    %194 = arith.divf %192, %193 : vector<2x192xf32>
    %195 = vector.extract_strided_slice %188 {offsets = [0, 192], sizes = [2, 64], strides = [1, 1]} : vector<2x256xf32> to vector<2x64xf32>
    %196 = math.tanh %195 : vector<2x64xf32>
    %197 = vector.extract_strided_slice %194 {offsets = [0, 0], sizes = [2, 64], strides = [1, 1]} : vector<2x192xf32> to vector<2x64xf32>
    %198 = vector.extract_strided_slice %194 {offsets = [0, 64], sizes = [2, 64], strides = [1, 1]} : vector<2x192xf32> to vector<2x64xf32>
    %199 = vector.extract_strided_slice %194 {offsets = [0, 128], sizes = [2, 64], strides = [1, 1]} : vector<2x192xf32> to vector<2x64xf32>
    %200 = arith.mulf %198, %181 : vector<2x64xf32>
    %201 = arith.mulf %197, %196 : vector<2x64xf32>
    %202 = arith.addf %200, %201 : vector<2x64xf32>
    %203 = math.tanh %202 : vector<2x64xf32>
    %204 = arith.mulf %199, %203 : vector<2x64xf32>
    %c6_i32_76 = arith.constant 6 : i32
    %205 = arith.index_cast %c6_i32_76 : i32 to index
    %c0_77 = arith.constant 0 : index
    %c0_78 = arith.constant 0 : index
    %206 = vector.load %arg7[%205, %c0_77, %c0_78] : memref<8x2x256xf32, #tpu.memory_space<vmem>>, vector<1x2x256xf32>
    %207 = vector.shape_cast %206 : vector<1x2x256xf32> to vector<2x256xf32>
    %cst_79 = arith.constant dense<0.000000e+00> : vector<2x256xf32>
    %208 = tpu.matmul %204, %76, %cst_79 {dimension_numbers = #tpu.dot_dimension_numbers<[1], [0], [0], [1], [0, 0, 1, 1], [], []>} : vector<2x64xf32>, vector<64x256xf32>, vector<2x256xf32> -> vector<2x256xf32>
    %209 = arith.addf %207, %208 : vector<2x256xf32>
    %210 = vector.extract_strided_slice %209 {offsets = [0, 0], sizes = [2, 192], strides = [1, 1]} : vector<2x256xf32> to vector<2x192xf32>
    %211 = arith.negf %210 : vector<2x192xf32>
    %212 = math.exp %211 : vector<2x192xf32>
    %cst_80 = arith.constant 1.000000e+00 : f32
    %213 = vector.broadcast %cst_80 : f32 to vector<2x192xf32>
    %214 = arith.addf %213, %212 : vector<2x192xf32>
    %215 = arith.divf %213, %214 : vector<2x192xf32>
    %216 = vector.extract_strided_slice %209 {offsets = [0, 192], sizes = [2, 64], strides = [1, 1]} : vector<2x256xf32> to vector<2x64xf32>
    %217 = math.tanh %216 : vector<2x64xf32>
    %218 = vector.extract_strided_slice %215 {offsets = [0, 0], sizes = [2, 64], strides = [1, 1]} : vector<2x192xf32> to vector<2x64xf32>
    %219 = vector.extract_strided_slice %215 {offsets = [0, 64], sizes = [2, 64], strides = [1, 1]} : vector<2x192xf32> to vector<2x64xf32>
    %220 = vector.extract_strided_slice %215 {offsets = [0, 128], sizes = [2, 64], strides = [1, 1]} : vector<2x192xf32> to vector<2x64xf32>
    %221 = arith.mulf %219, %202 : vector<2x64xf32>
    %222 = arith.mulf %218, %217 : vector<2x64xf32>
    %223 = arith.addf %221, %222 : vector<2x64xf32>
    %224 = math.tanh %223 : vector<2x64xf32>
    %225 = arith.mulf %220, %224 : vector<2x64xf32>
    %c7_i32_81 = arith.constant 7 : i32
    %226 = arith.index_cast %c7_i32_81 : i32 to index
    %c0_82 = arith.constant 0 : index
    %c0_83 = arith.constant 0 : index
    %227 = vector.load %arg7[%226, %c0_82, %c0_83] : memref<8x2x256xf32, #tpu.memory_space<vmem>>, vector<1x2x256xf32>
    %228 = vector.shape_cast %227 : vector<1x2x256xf32> to vector<2x256xf32>
    %cst_84 = arith.constant dense<0.000000e+00> : vector<2x256xf32>
    %229 = tpu.matmul %225, %76, %cst_84 {dimension_numbers = #tpu.dot_dimension_numbers<[1], [0], [0], [1], [0, 0, 1, 1], [], []>} : vector<2x64xf32>, vector<64x256xf32>, vector<2x256xf32> -> vector<2x256xf32>
    %230 = arith.addf %228, %229 : vector<2x256xf32>
    %231 = vector.extract_strided_slice %230 {offsets = [0, 0], sizes = [2, 192], strides = [1, 1]} : vector<2x256xf32> to vector<2x192xf32>
    %232 = arith.negf %231 : vector<2x192xf32>
    %233 = math.exp %232 : vector<2x192xf32>
    %cst_85 = arith.constant 1.000000e+00 : f32
    %234 = vector.broadcast %cst_85 : f32 to vector<2x192xf32>
    %235 = arith.addf %234, %233 : vector<2x192xf32>
    %236 = arith.divf %234, %235 : vector<2x192xf32>
    %237 = vector.extract_strided_slice %230 {offsets = [0, 192], sizes = [2, 64], strides = [1, 1]} : vector<2x256xf32> to vector<2x64xf32>
    %238 = math.tanh %237 : vector<2x64xf32>
    %239 = vector.extract_strided_slice %236 {offsets = [0, 0], sizes = [2, 64], strides = [1, 1]} : vector<2x192xf32> to vector<2x64xf32>
    %240 = vector.extract_strided_slice %236 {offsets = [0, 64], sizes = [2, 64], strides = [1, 1]} : vector<2x192xf32> to vector<2x64xf32>
    %241 = vector.extract_strided_slice %236 {offsets = [0, 128], sizes = [2, 64], strides = [1, 1]} : vector<2x192xf32> to vector<2x64xf32>
    %242 = arith.mulf %240, %223 : vector<2x64xf32>
    %243 = arith.mulf %239, %238 : vector<2x64xf32>
    %244 = arith.addf %242, %243 : vector<2x64xf32>
    %245 = math.tanh %244 : vector<2x64xf32>
    %246 = arith.mulf %241, %245 : vector<2x64xf32>
    %c8_i32_86 = arith.constant 8 : i32
    %c0_87 = arith.constant 0 : index
    %c0_88 = arith.constant 0 : index
    %247 = vector.load %arg4[%c0_87, %c0_88] : memref<64x1xf32, #tpu.memory_space<vmem>>, vector<64x1xf32>
    %cst_89 = arith.constant dense<0.000000e+00> : vector<2x1xf32>
    %248 = tpu.matmul %246, %247, %cst_89 {dimension_numbers = #tpu.dot_dimension_numbers<[1], [0], [0], [1], [0, 0, 1, 1], [], []>} : vector<2x64xf32>, vector<64x1xf32>, vector<2x1xf32> -> vector<2x1xf32>
    %c0_90 = arith.constant 0 : index
    %c0_91 = arith.constant 0 : index
    %249 = vector.load %arg5[%c0_90, %c0_91] : memref<1x1xf32, #tpu.memory_space<vmem>>, vector<1x1xf32>
    %250 = vector.broadcast %249 : vector<1x1xf32> to vector<2x1xf32>
    %251 = arith.addf %248, %250 : vector<2x1xf32>
    %252 = arith.negf %251 : vector<2x1xf32>
    %253 = math.exp %252 : vector<2x1xf32>
    %cst_92 = arith.constant 1.000000e+00 : f32
    %254 = vector.broadcast %cst_92 : f32 to vector<2x1xf32>
    %255 = arith.addf %254, %253 : vector<2x1xf32>
    %256 = arith.divf %254, %255 : vector<2x1xf32>
    %c0_93 = arith.constant 0 : index
    %c0_94 = arith.constant 0 : index
    %257 = vector.load %arg6[%c0_93, %c0_94] : memref<2x1xf32, #tpu.memory_space<vmem>>, vector<2x1xf32>
    tpu.vector_store %arg6[%c0_93, %c0_94], %256 {strides = array<i32>} : memref<2x1xf32, #tpu.memory_space<vmem>>, vector<2x1xf32>,
    return
  }
}

</mosaic_0001>

<llo_original>
// kernel: simple_lstm_forward.1
$region0: #{simple_lstm_forward.1}
  #allocation0 [shape = 'u32[]', space=smem, size = 0x4, offset = 0x4, fixed_abs, tag = 'smem constant byte address 0x4 - core index']
  #allocation1 [shape = 'u32[144,128]{1,0:T(1,128)}', space=vmem, size = 0x12000, scoped, tag = 'internal scratch']
  #allocation2 [shape = 'f32[8,2,256]{2,1,0:T(2,128)}', space=vmem, size = 0x4000, scoped, tag = 'scratch operand']
  #allocation3 [shape = 'f32[1,1]{1,0:T(1,128)S(1)}', space=vmem, size = 0x200, scoped, tag = 'scoped memory for simple_lstm_forward.1']
  %s0 = inlined_call_operand.vmem [shape: f32[8,2,32], index: 0, kind: input, shape index: {}]
  %s1 = inlined_call_operand.vmem [shape: f32[32,256], index: 1, kind: input, shape index: {}]
  %s2 = inlined_call_operand.vmem [shape: f32[64,256], index: 2, kind: input, shape index: {}]
  %s3 = inlined_call_operand.vmem [shape: f32[1,256], index: 3, kind: input, shape index: {}]
  %s4 = inlined_call_operand.vmem [shape: f32[64,1], index: 4, kind: input, shape index: {}]
  %s5 = inlined_call_operand.<no memory space> [shape: f32[1,1], index: 5, kind: input, shape index: {}]
  %s6 = inlined_call_operand.vmem [shape: f32[2,1], index: 6, kind: output, shape index: {}]
  %s7 = sld [smem:[#allocation0]]
  $region34: #{simple_lstm_forward.1} parent=0
    _
  %s9 = ssub.s32 1, %s7
  %s10 = scalar_select 0, %s9, %s7
  %v11 = vstv %s5
  %12 = vst [vmem:[#allocation3] sm:$0x1] %v11
  // Predicated region
  $region2: #{simple_lstm_forward.1} parent=0 // pred_check
    _
  $region3: #{simple_lstm_forward.1} parent=0 // pred_check_branch
    %14 = sbr.rel (0) target = $region5
  $region4: #{simple_lstm_forward.1} parent=0 // pred_region
    _
  $region5: #{simple_lstm_forward.1} parent=0 // pred_fallthru
    _
  // Predicated region
  $region6: #{simple_lstm_forward.1} parent=0 // pred_check
    _
  $region7: #{simple_lstm_forward.1} parent=0 // pred_check_branch
    %16 = sbr.rel (0) target = $region9
  $region8: #{simple_lstm_forward.1} parent=0 // pred_region
    _
  $region9: #{simple_lstm_forward.1} parent=0 // pred_fallthru
    _
  // Predicated region
  $region10: #{simple_lstm_forward.1} parent=0 // pred_check
    _
  $region11: #{simple_lstm_forward.1} parent=0 // pred_check_branch
    %18 = sbr.rel (0) target = $region13
  $region12: #{simple_lstm_forward.1} parent=0 // pred_region
    _
  $region13: #{simple_lstm_forward.1} parent=0 // pred_fallthru
    _
  // Predicated region
  $region14: #{simple_lstm_forward.1} parent=0 // pred_check
    _
  $region15: #{simple_lstm_forward.1} parent=0 // pred_check_branch
    %20 = sbr.rel (0) target = $region17
  $region16: #{simple_lstm_forward.1} parent=0 // pred_region
    _
  $region17: #{simple_lstm_forward.1} parent=0 // pred_fallthru
    _
  // Predicated region
  $region18: #{simple_lstm_forward.1} parent=0 // pred_check
    _
  $region19: #{simple_lstm_forward.1} parent=0 // pred_check_branch
    %22 = sbr.rel (0) target = $region21
  $region20: #{simple_lstm_forward.1} parent=0 // pred_region
    _
  $region21: #{simple_lstm_forward.1} parent=0 // pred_fallthru
    _
  // Predicated region
  $region22: #{simple_lstm_forward.1} parent=0 // pred_check
    _
  $region23: #{simple_lstm_forward.1} parent=0 // pred_check_branch
    %24 = sbr.rel (0) target = $region25
  $region24: #{simple_lstm_forward.1} parent=0 // pred_region
    _
  $region25: #{simple_lstm_forward.1} parent=0 // pred_fallthru
    _
  %v25 = vld [vmem:[%s1] sm:$0xff]
  %v26 = vld [vmem:[%s1 + $0x8] sm:$0xff]
  %v27 = vld [vmem:[%s1 + $0x10] sm:$0xff]
  %v28 = vld [vmem:[%s1 + $0x18] sm:$0xff]
  %v29 = vld [vmem:[%s1 + $0x20] sm:$0xff]
  %v30 = vld [vmem:[%s1 + $0x28] sm:$0xff]
  %v31 = vld [vmem:[%s1 + $0x30] sm:$0xff]
  %v32 = vld [vmem:[%s1 + $0x38] sm:$0xff]
  %v33 = vld [vmem:[%s3] sm:$0x3]
  %v35 = vlaneseq
  %v36 = vshrl.u32 %v35, 7
  %v37 = vsub.s32 0, %v36
  %v38 = vrot.slane %v33, %v37
  %v39 = vlaneseq
  %v40 = vshrl.u32 %v39, 7
  %v41 = vsub.s32 1, %v40
  %v42 = vrot.slane %v33, %v41
  %v45 = vld [vmem:[%s0] sm:$0x3]
  %vm46 = vcmask 261120
  %v48 = vsel %vm46, %v45, 0
  %50 = vmatprep.subr.mxu0 %v26
  %51 = vmatpush1.msra.mxu0 %v25
  %52 = vmatprep.subr.mxu0 %v28
  %53 = vmatpush1.msra.mxu0 %v27
  %54 = vmatprep.subr.mxu0 %v30
  %55 = vmatpush1.msra.mxu0 %v29
  %56 = vmatprep.subr.mxu0 %v32
  %57 = vmatpush1.msra.mxu0 %v31
  %58 = vmatprep.subr.mxu0 0.0
  %59 = vmatpush1.msra.mxu0 0.0
  %60 = vmatprep.subr.mxu0 0.0
  %61 = vmatpush1.msra.mxu0 0.0
  %62 = vmatprep.subr.mxu0 0.0
  %63 = vmatpush1.msra.mxu0 0.0
  %64 = vmatprep.subr.mxu0 0.0
  %65 = vmatpush1.msra.mxu0 0.0
  %66 = vmatprep.subr.mxu0 0.0
  %67 = vmatpush1.msra.mxu0 0.0
  %68 = vmatprep.subr.mxu0 0.0
  %69 = vmatpush1.msra.mxu0 0.0
  %70 = vmatprep.subr.mxu0 0.0
  %71 = vmatpush1.msra.mxu0 0.0
  %72 = vmatprep.subr.mxu0 0.0
  %73 = vmatpush1.msra.mxu0 0.0
  %74 = vmatprep.subr.mxu0 0.0
  %75 = vmatpush1.msra.mxu0 0.0
  %76 = vmatprep.subr.mxu0 0.0
  %77 = vmatpush1.msra.mxu0 0.0
  %78 = vmatprep.subr.mxu0 0.0
  %79 = vmatpush1.msra.mxu0 0.0
  %80 = vmatprep.subr.mxu0 0.0
  %81 = vmatpush1.msra.mxu0 0.0
  %82 = vmatprep.subr.mxu0 0.0
  %83 = vmatpush1.msra.mxu0 0.0
  %84 = vmatprep.subr.mxu0 0.0
  %85 = vmatpush1.msra.mxu0 0.0
  %86 = vmatprep.subr.mxu0 0.0
  %87 = vmatpush1.msra.mxu0 0.0
  %88 = vmatprep.subr.mxu0 0.0
  %89 = vmatpush1.msra.mxu0 0.0
  %90 = vmatprep.subr.mxu0 0.0
  %91 = vmatpush1.msra.mxu0 0.0
  %92 = vmatprep.subr.mxu0 0.0
  %93 = vmatpush1.msra.mxu0 0.0
  %94 = vmatprep.subr.mxu0 0.0
  %95 = vmatpush1.msra.mxu0 0.0
  %96 = vmatprep.subr.mxu0 0.0
  %97 = vmatpush1.msra.mxu0 0.0
  %98 = vmatprep.subr.mxu0 0.0
  %99 = vmatpush1.msra.mxu0 0.0
  %100 = vmatprep.subr.mxu0 0.0
  %101 = vmatpush1.msra.mxu0 0.0
  %102 = vmatprep.subr.mxu0 0.0
  %103 = vmatpush1.msra.mxu0 0.0
  %104 = vmatprep.subr.mxu0 0.0
  %105 = vmatpush1.msra.mxu0 0.0
  %106 = vmatprep.subr.mxu0 0.0
  %107 = vmatpush1.msra.mxu0 0.0
  %108 = vmatprep.subr.mxu0 0.0
  %109 = vmatpush1.msra.mxu0 0.0
  %110 = vmatprep.subr.mxu0 0.0
  %111 = vmatpush1.msra.mxu0 0.0
  %112 = vmatprep.subr.mxu0 0.0
  %113 = vmatpush1.msra.mxu0 0.0
  %114 = vmatprep.mubr.f32.mxu0 0.0
  %115 = vmatmul.mubr.f32.gmra.mrb[0].mxu0 %v48
  %v116 = vpop.f32.mrb[0].mxu0
  %v117 = vadd.f32 %v38, %v116
  %v118 = vpop.f32.mrb[0].mxu0
  %v119 = vadd.f32 %v42, %v118
  %120 = vdwg.mxu0
  %v123 = vcombine.low %v117, %v119
  %v125 = vunpack.c.l.s4 1983009808
  %v126 = vunpack.c.0.s8 %v125
  %v127 = vlaneseq
  %v128 = vshrl.u32 %v127, 7
  %v129 = vsub.s32 %v126, %v128
  %v130 = vrot.slane %v123, %v129
  %132 = vst [vmem:[#allocation2] sm:$0xf] %v130
  %s133 = scalar_lea.vmem %s0, 2
  %v134 = vld [vmem:[%s133] sm:$0x3]
  %v136 = vsel %vm46, %v134, 0
  %138 = vmatprep.subr.mxu0 %v26
  %139 = vmatpush1.msra.mxu0 %v25
  %140 = vmatprep.subr.mxu0 %v28
  %141 = vmatpush1.msra.mxu0 %v27
  %142 = vmatprep.subr.mxu0 %v30
  %143 = vmatpush1.msra.mxu0 %v29
  %144 = vmatprep.subr.mxu0 %v32
  %145 = vmatpush1.msra.mxu0 %v31
  %146 = vmatprep.subr.mxu0 0.0
  %147 = vmatpush1.msra.mxu0 0.0
  %148 = vmatprep.subr.mxu0 0.0
  %149 = vmatpush1.msra.mxu0 0.0
  %150 = vmatprep.subr.mxu0 0.0
  %151 = vmatpush1.msra.mxu0 0.0
  %152 = vmatprep.subr.mxu0 0.0
  %153 = vmatpush1.msra.mxu0 0.0
  %154 = vmatprep.subr.mxu0 0.0
  %155 = vmatpush1.msra.mxu0 0.0
  %156 = vmatprep.subr.mxu0 0.0
  %157 = vmatpush1.msra.mxu0 0.0
  %158 = vmatprep.subr.mxu0 0.0
  %159 = vmatpush1.msra.mxu0 0.0
  %160 = vmatprep.subr.mxu0 0.0
  %161 = vmatpush1.msra.mxu0 0.0
  %162 = vmatprep.subr.mxu0 0.0
  %163 = vmatpush1.msra.mxu0 0.0
  %164 = vmatprep.subr.mxu0 0.0
  %165 = vmatpush1.msra.mxu0 0.0
  %166 = vmatprep.subr.mxu0 0.0
  %167 = vmatpush1.msra.mxu0 0.0
  %168 = vmatprep.subr.mxu0 0.0
  %169 = vmatpush1.msra.mxu0 0.0
  %170 = vmatprep.subr.mxu0 0.0
  %171 = vmatpush1.msra.mxu0 0.0
  %172 = vmatprep.subr.mxu0 0.0
  %173 = vmatpush1.msra.mxu0 0.0
  %174 = vmatprep.subr.mxu0 0.0
  %175 = vmatpush1.msra.mxu0 0.0
  %176 = vmatprep.subr.mxu0 0.0
  %177 = vmatpush1.msra.mxu0 0.0
  %178 = vmatprep.subr.mxu0 0.0
  %179 = vmatpush1.msra.mxu0 0.0
  %180 = vmatprep.subr.mxu0 0.0
  %181 = vmatpush1.msra.mxu0 0.0
  %182 = vmatprep.subr.mxu0 0.0
  %183 = vmatpush1.msra.mxu0 0.0
  %184 = vmatprep.subr.mxu0 0.0
  %185 = vmatpush1.msra.mxu0 0.0
  %186 = vmatprep.subr.mxu0 0.0
  %187 = vmatpush1.msra.mxu0 0.0
  %188 = vmatprep.subr.mxu0 0.0
  %189 = vmatpush1.msra.mxu0 0.0
  %190 = vmatprep.subr.mxu0 0.0
  %191 = vmatpush1.msra.mxu0 0.0
  %192 = vmatprep.subr.mxu0 0.0
  %193 = vmatpush1.msra.mxu0 0.0
  %194 = vmatprep.subr.mxu0 0.0
  %195 = vmatpush1.msra.mxu0 0.0
  %196 = vmatprep.subr.mxu0 0.0
  %197 = vmatpush1.msra.mxu0 0.0
  %198 = vmatprep.subr.mxu0 0.0
  %199 = vmatpush1.msra.mxu0 0.0
  %200 = vmatprep.subr.mxu0 0.0
  %201 = vmatpush1.msra.mxu0 0.0
  %202 = vmatprep.mubr.f32.mxu0 0.0
  %203 = vmatmul.mubr.f32.gmra.mrb[0].mxu0 %v136
  %v204 = vpop.f32.mrb[0].mxu0
  %v205 = vadd.f32 %v38, %v204
  %v206 = vpop.f32.mrb[0].mxu0
  %v207 = vadd.f32 %v42, %v206
  %208 = vdwg.mxu0
  %v211 = vcombine.low %v205, %v207
  %v213 = vunpack.c.l.s4 1983009808
  %v214 = vunpack.c.0.s8 %v213
  %v215 = vlaneseq
  %v216 = vshrl.u32 %v215, 7
  %v217 = vsub.s32 %v214, %v216
  %v218 = vrot.slane %v211, %v217
  %s220 = scalar_lea.vmem [#allocation2], 4
  %221 = vst [vmem:[%s220] sm:$0xf] %v218
  %s222 = scalar_lea.vmem %s0, 4
  %v223 = vld [vmem:[%s222] sm:$0x3]
  %v225 = vsel %vm46, %v223, 0
  %227 = vmatprep.subr.mxu0 %v26
  %228 = vmatpush1.msra.mxu0 %v25
  %229 = vmatprep.subr.mxu0 %v28
  %230 = vmatpush1.msra.mxu0 %v27
  %231 = vmatprep.subr.mxu0 %v30
  %232 = vmatpush1.msra.mxu0 %v29
  %233 = vmatprep.subr.mxu0 %v32
  %234 = vmatpush1.msra.mxu0 %v31
  %235 = vmatprep.subr.mxu0 0.0
  %236 = vmatpush1.msra.mxu0 0.0
  %237 = vmatprep.subr.mxu0 0.0
  %238 = vmatpush1.msra.mxu0 0.0
  %239 = vmatprep.subr.mxu0 0.0
  %240 = vmatpush1.msra.mxu0 0.0
  %241 = vmatprep.subr.mxu0 0.0
  %242 = vmatpush1.msra.mxu0 0.0
  %243 = vmatprep.subr.mxu0 0.0
  %244 = vmatpush1.msra.mxu0 0.0
  %245 = vmatprep.subr.mxu0 0.0
  %246 = vmatpush1.msra.mxu0 0.0
  %247 = vmatprep.subr.mxu0 0.0
  %248 = vmatpush1.msra.mxu0 0.0
  %249 = vmatprep.subr.mxu0 0.0
  %250 = vmatpush1.msra.mxu0 0.0
  %251 = vmatprep.subr.mxu0 0.0
  %252 = vmatpush1.msra.mxu0 0.0
  %253 = vmatprep.subr.mxu0 0.0
  %254 = vmatpush1.msra.mxu0 0.0
  %255 = vmatprep.subr.mxu0 0.0
  %256 = vmatpush1.msra.mxu0 0.0
  %257 = vmatprep.subr.mxu0 0.0
  %258 = vmatpush1.msra.mxu0 0.0
  %259 = vmatprep.subr.mxu0 0.0
  %260 = vmatpush1.msra.mxu0 0.0
  %261 = vmatprep.subr.mxu0 0.0
  %262 = vmatpush1.msra.mxu0 0.0
  %263 = vmatprep.subr.mxu0 0.0
  %264 = vmatpush1.msra.mxu0 0.0
  %265 = vmatprep.subr.mxu0 0.0
  %266 = vmatpush1.msra.mxu0 0.0
  %267 = vmatprep.subr.mxu0 0.0
  %268 = vmatpush1.msra.mxu0 0.0
  %269 = vmatprep.subr.mxu0 0.0
  %270 = vmatpush1.msra.mxu0 0.0
  %271 = vmatprep.subr.mxu0 0.0
  %272 = vmatpush1.msra.mxu0 0.0
  %273 = vmatprep.subr.mxu0 0.0
  %274 = vmatpush1.msra.mxu0 0.0
  %275 = vmatprep.subr.mxu0 0.0
  %276 = vmatpush1.msra.mxu0 0.0
  %277 = vmatprep.subr.mxu0 0.0
  %278 = vmatpush1.msra.mxu0 0.0
  %279 = vmatprep.subr.mxu0 0.0
  %280 = vmatpush1.msra.mxu0 0.0
  %281 = vmatprep.subr.mxu0 0.0
  %282 = vmatpush1.msra.mxu0 0.0
  %283 = vmatprep.subr.mxu0 0.0
  %284 = vmatpush1.msra.mxu0 0.0
  %285 = vmatprep.subr.mxu0 0.0
  %286 = vmatpush1.msra.mxu0 0.0
  %287 = vmatprep.subr.mxu0 0.0
  %288 = vmatpush1.msra.mxu0 0.0
  %289 = vmatprep.subr.mxu0 0.0
  %290 = vmatpush1.msra.mxu0 0.0
  %291 = vmatprep.mubr.f32.mxu0 0.0
  %292 = vmatmul.mubr.f32.gmra.mrb[0].mxu0 %v225
  %v293 = vpop.f32.mrb[0].mxu0
  %v294 = vadd.f32 %v38, %v293
  %v295 = vpop.f32.mrb[0].mxu0
  %v296 = vadd.f32 %v42, %v295
  %297 = vdwg.mxu0
  %v300 = vcombine.low %v294, %v296
  %v302 = vunpack.c.l.s4 1983009808
  %v303 = vunpack.c.0.s8 %v302
  %v304 = vlaneseq
  %v305 = vshrl.u32 %v304, 7
  %v306 = vsub.s32 %v303, %v305
  %v307 = vrot.slane %v300, %v306
  %s309 = scalar_lea.vmem [#allocation2], 8
  %310 = vst [vmem:[%s309] sm:$0xf] %v307
  %s311 = scalar_lea.vmem %s0, 6
  %v312 = vld [vmem:[%s311] sm:$0x3]
  %v314 = vsel %vm46, %v312, 0
  %316 = vmatprep.subr.mxu0 %v26
  %317 = vmatpush1.msra.mxu0 %v25
  %318 = vmatprep.subr.mxu0 %v28
  %319 = vmatpush1.msra.mxu0 %v27
  %320 = vmatprep.subr.mxu0 %v30
  %321 = vmatpush1.msra.mxu0 %v29
  %322 = vmatprep.subr.mxu0 %v32
  %323 = vmatpush1.msra.mxu0 %v31
  %324 = vmatprep.subr.mxu0 0.0
  %325 = vmatpush1.msra.mxu0 0.0
  %326 = vmatprep.subr.mxu0 0.0
  %327 = vmatpush1.msra.mxu0 0.0
  %328 = vmatprep.subr.mxu0 0.0
  %329 = vmatpush1.msra.mxu0 0.0
  %330 = vmatprep.subr.mxu0 0.0
  %331 = vmatpush1.msra.mxu0 0.0
  %332 = vmatprep.subr.mxu0 0.0
  %333 = vmatpush1.msra.mxu0 0.0
  %334 = vmatprep.subr.mxu0 0.0
  %335 = vmatpush1.msra.mxu0 0.0
  %336 = vmatprep.subr.mxu0 0.0
  %337 = vmatpush1.msra.mxu0 0.0
  %338 = vmatprep.subr.mxu0 0.0
  %339 = vmatpush1.msra.mxu0 0.0
  %340 = vmatprep.subr.mxu0 0.0
  %341 = vmatpush1.msra.mxu0 0.0
  %342 = vmatprep.subr.mxu0 0.0
  %343 = vmatpush1.msra.mxu0 0.0
  %344 = vmatprep.subr.mxu0 0.0
  %345 = vmatpush1.msra.mxu0 0.0
  %346 = vmatprep.subr.mxu0 0.0
  %347 = vmatpush1.msra.mxu0 0.0
  %348 = vmatprep.subr.mxu0 0.0
  %349 = vmatpush1.msra.mxu0 0.0
  %350 = vmatprep.subr.mxu0 0.0
  %351 = vmatpush1.msra.mxu0 0.0
  %352 = vmatprep.subr.mxu0 0.0
  %353 = vmatpush1.msra.mxu0 0.0
  %354 = vmatprep.subr.mxu0 0.0
  %355 = vmatpush1.msra.mxu0 0.0
  %356 = vmatprep.subr.mxu0 0.0
  %357 = vmatpush1.msra.mxu0 0.0
  %358 = vmatprep.subr.mxu0 0.0
  %359 = vmatpush1.msra.mxu0 0.0
  %360 = vmatprep.subr.mxu0 0.0
  %361 = vmatpush1.msra.mxu0 0.0
  %362 = vmatprep.subr.mxu0 0.0
  %363 = vmatpush1.msra.mxu0 0.0
  %364 = vmatprep.subr.mxu0 0.0
  %365 = vmatpush1.msra.mxu0 0.0
  %366 = vmatprep.subr.mxu0 0.0
  %367 = vmatpush1.msra.mxu0 0.0
  %368 = vmatprep.subr.mxu0 0.0
  %369 = vmatpush1.msra.mxu0 0.0
  %370 = vmatprep.subr.mxu0 0.0
  %371 = vmatpush1.msra.mxu0 0.0
  %372 = vmatprep.subr.mxu0 0.0
  %373 = vmatpush1.msra.mxu0 0.0
  %374 = vmatprep.subr.mxu0 0.0
  %375 = vmatpush1.msra.mxu0 0.0
  %376 = vmatprep.subr.mxu0 0.0
  %377 = vmatpush1.msra.mxu0 0.0
  %378 = vmatprep.subr.mxu0 0.0
  %379 = vmatpush1.msra.mxu0 0.0
  %380 = vmatprep.mubr.f32.mxu0 0.0
  %381 = vmatmul.mubr.f32.gmra.mrb[0].mxu0 %v314
  %v382 = vpop.f32.mrb[0].mxu0
  %v383 = vadd.f32 %v38, %v382
  %v384 = vpop.f32.mrb[0].mxu0
  %v385 = vadd.f32 %v42, %v384
  %386 = vdwg.mxu0
  %v389 = vcombine.low %v383, %v385
  %v391 = vunpack.c.l.s4 1983009808
  %v392 = vunpack.c.0.s8 %v391
  %v393 = vlaneseq
  %v394 = vshrl.u32 %v393, 7
  %v395 = vsub.s32 %v392, %v394
  %v396 = vrot.slane %v389, %v395
  %s398 = scalar_lea.vmem [#allocation2], 12
  %399 = vst [vmem:[%s398] sm:$0xf] %v396
  %s400 = scalar_lea.vmem %s0, 8
  %v401 = vld [vmem:[%s400] sm:$0x3]
  %v403 = vsel %vm46, %v401, 0
  %405 = vmatprep.subr.mxu0 %v26
  %406 = vmatpush1.msra.mxu0 %v25
  %407 = vmatprep.subr.mxu0 %v28
  %408 = vmatpush1.msra.mxu0 %v27
  %409 = vmatprep.subr.mxu0 %v30
  %410 = vmatpush1.msra.mxu0 %v29
  %411 = vmatprep.subr.mxu0 %v32
  %412 = vmatpush1.msra.mxu0 %v31
  %413 = vmatprep.subr.mxu0 0.0
  %414 = vmatpush1.msra.mxu0 0.0
  %415 = vmatprep.subr.mxu0 0.0
  %416 = vmatpush1.msra.mxu0 0.0
  %417 = vmatprep.subr.mxu0 0.0
  %418 = vmatpush1.msra.mxu0 0.0
  %419 = vmatprep.subr.mxu0 0.0
  %420 = vmatpush1.msra.mxu0 0.0
  %421 = vmatprep.subr.mxu0 0.0
  %422 = vmatpush1.msra.mxu0 0.0
  %423 = vmatprep.subr.mxu0 0.0
  %424 = vmatpush1.msra.mxu0 0.0
  %425 = vmatprep.subr.mxu0 0.0
  %426 = vmatpush1.msra.mxu0 0.0
  %427 = vmatprep.subr.mxu0 0.0
  %428 = vmatpush1.msra.mxu0 0.0
  %429 = vmatprep.subr.mxu0 0.0
  %430 = vmatpush1.msra.mxu0 0.0
  %431 = vmatprep.subr.mxu0 0.0
  %432 = vmatpush1.msra.mxu0 0.0
  %433 = vmatprep.subr.mxu0 0.0
  %434 = vmatpush1.msra.mxu0 0.0
  %435 = vmatprep.subr.mxu0 0.0
  %436 = vmatpush1.msra.mxu0 0.0
  %437 = vmatprep.subr.mxu0 0.0
  %438 = vmatpush1.msra.mxu0 0.0
  %439 = vmatprep.subr.mxu0 0.0
  %440 = vmatpush1.msra.mxu0 0.0
  %441 = vmatprep.subr.mxu0 0.0
  %442 = vmatpush1.msra.mxu0 0.0
  %443 = vmatprep.subr.mxu0 0.0
  %444 = vmatpush1.msra.mxu0 0.0
  %445 = vmatprep.subr.mxu0 0.0
  %446 = vmatpush1.msra.mxu0 0.0
  %447 = vmatprep.subr.mxu0 0.0
  %448 = vmatpush1.msra.mxu0 0.0
  %449 = vmatprep.subr.mxu0 0.0
  %450 = vmatpush1.msra.mxu0 0.0
  %451 = vmatprep.subr.mxu0 0.0
  %452 = vmatpush1.msra.mxu0 0.0
  %453 = vmatprep.subr.mxu0 0.0
  %454 = vmatpush1.msra.mxu0 0.0
  %455 = vmatprep.subr.mxu0 0.0
  %456 = vmatpush1.msra.mxu0 0.0
  %457 = vmatprep.subr.mxu0 0.0
  %458 = vmatpush1.msra.mxu0 0.0
  %459 = vmatprep.subr.mxu0 0.0
  %460 = vmatpush1.msra.mxu0 0.0
  %461 = vmatprep.subr.mxu0 0.0
  %462 = vmatpush1.msra.mxu0 0.0
  %463 = vmatprep.subr.mxu0 0.0
  %464 = vmatpush1.msra.mxu0 0.0
  %465 = vmatprep.subr.mxu0 0.0
  %466 = vmatpush1.msra.mxu0 0.0
  %467 = vmatprep.subr.mxu0 0.0
  %468 = vmatpush1.msra.mxu0 0.0
  %469 = vmatprep.mubr.f32.mxu0 0.0
  %470 = vmatmul.mubr.f32.gmra.mrb[0].mxu0 %v403
  %v471 = vpop.f32.mrb[0].mxu0
  %v472 = vadd.f32 %v38, %v471
  %v473 = vpop.f32.mrb[0].mxu0
  %v474 = vadd.f32 %v42, %v473
  %475 = vdwg.mxu0
  %v478 = vcombine.low %v472, %v474
  %v480 = vunpack.c.l.s4 1983009808
  %v481 = vunpack.c.0.s8 %v480
  %v482 = vlaneseq
  %v483 = vshrl.u32 %v482, 7
  %v484 = vsub.s32 %v481, %v483
  %v485 = vrot.slane %v478, %v484
  %s487 = scalar_lea.vmem [#allocation2], 16
  %488 = vst [vmem:[%s487] sm:$0xf] %v485
  %s489 = scalar_lea.vmem %s0, 10
  %v490 = vld [vmem:[%s489] sm:$0x3]
  %v492 = vsel %vm46, %v490, 0
  %494 = vmatprep.subr.mxu0 %v26
  %495 = vmatpush1.msra.mxu0 %v25
  %496 = vmatprep.subr.mxu0 %v28
  %497 = vmatpush1.msra.mxu0 %v27
  %498 = vmatprep.subr.mxu0 %v30
  %499 = vmatpush1.msra.mxu0 %v29
  %500 = vmatprep.subr.mxu0 %v32
  %501 = vmatpush1.msra.mxu0 %v31
  %502 = vmatprep.subr.mxu0 0.0
  %503 = vmatpush1.msra.mxu0 0.0
  %504 = vmatprep.subr.mxu0 0.0
  %505 = vmatpush1.msra.mxu0 0.0
  %506 = vmatprep.subr.mxu0 0.0
  %507 = vmatpush1.msra.mxu0 0.0
  %508 = vmatprep.subr.mxu0 0.0
  %509 = vmatpush1.msra.mxu0 0.0
  %510 = vmatprep.subr.mxu0 0.0
  %511 = vmatpush1.msra.mxu0 0.0
  %512 = vmatprep.subr.mxu0 0.0
  %513 = vmatpush1.msra.mxu0 0.0
  %514 = vmatprep.subr.mxu0 0.0
  %515 = vmatpush1.msra.mxu0 0.0
  %516 = vmatprep.subr.mxu0 0.0
  %517 = vmatpush1.msra.mxu0 0.0
  %518 = vmatprep.subr.mxu0 0.0
  %519 = vmatpush1.msra.mxu0 0.0
  %520 = vmatprep.subr.mxu0 0.0
  %521 = vmatpush1.msra.mxu0 0.0
  %522 = vmatprep.subr.mxu0 0.0
  %523 = vmatpush1.msra.mxu0 0.0
  %524 = vmatprep.subr.mxu0 0.0
  %525 = vmatpush1.msra.mxu0 0.0
  %526 = vmatprep.subr.mxu0 0.0
  %527 = vmatpush1.msra.mxu0 0.0
  %528 = vmatprep.subr.mxu0 0.0
  %529 = vmatpush1.msra.mxu0 0.0
  %530 = vmatprep.subr.mxu0 0.0
  %531 = vmatpush1.msra.mxu0 0.0
  %532 = vmatprep.subr.mxu0 0.0
  %533 = vmatpush1.msra.mxu0 0.0
  %534 = vmatprep.subr.mxu0 0.0
  %535 = vmatpush1.msra.mxu0 0.0
  %536 = vmatprep.subr.mxu0 0.0
  %537 = vmatpush1.msra.mxu0 0.0
  %538 = vmatprep.subr.mxu0 0.0
  %539 = vmatpush1.msra.mxu0 0.0
  %540 = vmatprep.subr.mxu0 0.0
  %541 = vmatpush1.msra.mxu0 0.0
  %542 = vmatprep.subr.mxu0 0.0
  %543 = vmatpush1.msra.mxu0 0.0
  %544 = vmatprep.subr.mxu0 0.0
  %545 = vmatpush1.msra.mxu0 0.0
  %546 = vmatprep.subr.mxu0 0.0
  %547 = vmatpush1.msra.mxu0 0.0
  %548 = vmatprep.subr.mxu0 0.0
  %549 = vmatpush1.msra.mxu0 0.0
  %550 = vmatprep.subr.mxu0 0.0
  %551 = vmatpush1.msra.mxu0 0.0
  %552 = vmatprep.subr.mxu0 0.0
  %553 = vmatpush1.msra.mxu0 0.0
  %554 = vmatprep.subr.mxu0 0.0
  %555 = vmatpush1.msra.mxu0 0.0
  %556 = vmatprep.subr.mxu0 0.0
  %557 = vmatpush1.msra.mxu0 0.0
  %558 = vmatprep.mubr.f32.mxu0 0.0
  %559 = vmatmul.mubr.f32.gmra.mrb[0].mxu0 %v492
  %v560 = vpop.f32.mrb[0].mxu0
  %v561 = vadd.f32 %v38, %v560
  %v562 = vpop.f32.mrb[0].mxu0
  %v563 = vadd.f32 %v42, %v562
  %564 = vdwg.mxu0
  %v567 = vcombine.low %v561, %v563
  %v569 = vunpack.c.l.s4 1983009808
  %v570 = vunpack.c.0.s8 %v569
  %v571 = vlaneseq
  %v572 = vshrl.u32 %v571, 7
  %v573 = vsub.s32 %v570, %v572
  %v574 = vrot.slane %v567, %v573
  %s576 = scalar_lea.vmem [#allocation2], 20
  %577 = vst [vmem:[%s576] sm:$0xf] %v574
  %s578 = scalar_lea.vmem %s0, 12
  %v579 = vld [vmem:[%s578] sm:$0x3]
  %v581 = vsel %vm46, %v579, 0
  %583 = vmatprep.subr.mxu0 %v26
  %584 = vmatpush1.msra.mxu0 %v25
  %585 = vmatprep.subr.mxu0 %v28
  %586 = vmatpush1.msra.mxu0 %v27
  %587 = vmatprep.subr.mxu0 %v30
  %588 = vmatpush1.msra.mxu0 %v29
  %589 = vmatprep.subr.mxu0 %v32
  %590 = vmatpush1.msra.mxu0 %v31
  %591 = vmatprep.subr.mxu0 0.0
  %592 = vmatpush1.msra.mxu0 0.0
  %593 = vmatprep.subr.mxu0 0.0
  %594 = vmatpush1.msra.mxu0 0.0
  %595 = vmatprep.subr.mxu0 0.0
  %596 = vmatpush1.msra.mxu0 0.0
  %597 = vmatprep.subr.mxu0 0.0
  %598 = vmatpush1.msra.mxu0 0.0
  %599 = vmatprep.subr.mxu0 0.0
  %600 = vmatpush1.msra.mxu0 0.0
  %601 = vmatprep.subr.mxu0 0.0
  %602 = vmatpush1.msra.mxu0 0.0
  %603 = vmatprep.subr.mxu0 0.0
  %604 = vmatpush1.msra.mxu0 0.0
  %605 = vmatprep.subr.mxu0 0.0
  %606 = vmatpush1.msra.mxu0 0.0
  %607 = vmatprep.subr.mxu0 0.0
  %608 = vmatpush1.msra.mxu0 0.0
  %609 = vmatprep.subr.mxu0 0.0
  %610 = vmatpush1.msra.mxu0 0.0
  %611 = vmatprep.subr.mxu0 0.0
  %612 = vmatpush1.msra.mxu0 0.0
  %613 = vmatprep.subr.mxu0 0.0
  %614 = vmatpush1.msra.mxu0 0.0
  %615 = vmatprep.subr.mxu0 0.0
  %616 = vmatpush1.msra.mxu0 0.0
  %617 = vmatprep.subr.mxu0 0.0
  %618 = vmatpush1.msra.mxu0 0.0
  %619 = vmatprep.subr.mxu0 0.0
  %620 = vmatpush1.msra.mxu0 0.0
  %621 = vmatprep.subr.mxu0 0.0
  %622 = vmatpush1.msra.mxu0 0.0
  %623 = vmatprep.subr.mxu0 0.0
  %624 = vmatpush1.msra.mxu0 0.0
  %625 = vmatprep.subr.mxu0 0.0
  %626 = vmatpush1.msra.mxu0 0.0
  %627 = vmatprep.subr.mxu0 0.0
  %628 = vmatpush1.msra.mxu0 0.0
  %629 = vmatprep.subr.mxu0 0.0
  %630 = vmatpush1.msra.mxu0 0.0
  %631 = vmatprep.subr.mxu0 0.0
  %632 = vmatpush1.msra.mxu0 0.0
  %633 = vmatprep.subr.mxu0 0.0
  %634 = vmatpush1.msra.mxu0 0.0
  %635 = vmatprep.subr.mxu0 0.0
  %636 = vmatpush1.msra.mxu0 0.0
  %637 = vmatprep.subr.mxu0 0.0
  %638 = vmatpush1.msra.mxu0 0.0
  %639 = vmatprep.subr.mxu0 0.0
  %640 = vmatpush1.msra.mxu0 0.0
  %641 = vmatprep.subr.mxu0 0.0
  %642 = vmatpush1.msra.mxu0 0.0
  %643 = vmatprep.subr.mxu0 0.0
  %644 = vmatpush1.msra.mxu0 0.0
  %645 = vmatprep.subr.mxu0 0.0
  %646 = vmatpush1.msra.mxu0 0.0
  %647 = vmatprep.mubr.f32.mxu0 0.0
  %648 = vmatmul.mubr.f32.gmra.mrb[0].mxu0 %v581
  %v649 = vpop.f32.mrb[0].mxu0
  %v650 = vadd.f32 %v38, %v649
  %v651 = vpop.f32.mrb[0].mxu0
  %v652 = vadd.f32 %v42, %v651
  %653 = vdwg.mxu0
  %v656 = vcombine.low %v650, %v652
  %v658 = vunpack.c.l.s4 1983009808
  %v659 = vunpack.c.0.s8 %v658
  %v660 = vlaneseq
  %v661 = vshrl.u32 %v660, 7
  %v662 = vsub.s32 %v659, %v661
  %v663 = vrot.slane %v656, %v662
  %s665 = scalar_lea.vmem [#allocation2], 24
  %666 = vst [vmem:[%s665] sm:$0xf] %v663
  %s667 = scalar_lea.vmem %s0, 14
  %v668 = vld [vmem:[%s667] sm:$0x3]
  %v670 = vsel %vm46, %v668, 0
  %672 = vmatprep.subr.mxu0 %v26
  %673 = vmatpush1.msra.mxu0 %v25
  %674 = vmatprep.subr.mxu0 %v28
  %675 = vmatpush1.msra.mxu0 %v27
  %676 = vmatprep.subr.mxu0 %v30
  %677 = vmatpush1.msra.mxu0 %v29
  %678 = vmatprep.subr.mxu0 %v32
  %679 = vmatpush1.msra.mxu0 %v31
  %680 = vmatprep.subr.mxu0 0.0
  %681 = vmatpush1.msra.mxu0 0.0
  %682 = vmatprep.subr.mxu0 0.0
  %683 = vmatpush1.msra.mxu0 0.0
  %684 = vmatprep.subr.mxu0 0.0
  %685 = vmatpush1.msra.mxu0 0.0
  %686 = vmatprep.subr.mxu0 0.0
  %687 = vmatpush1.msra.mxu0 0.0
  %688 = vmatprep.subr.mxu0 0.0
  %689 = vmatpush1.msra.mxu0 0.0
  %690 = vmatprep.subr.mxu0 0.0
  %691 = vmatpush1.msra.mxu0 0.0
  %692 = vmatprep.subr.mxu0 0.0
  %693 = vmatpush1.msra.mxu0 0.0
  %694 = vmatprep.subr.mxu0 0.0
  %695 = vmatpush1.msra.mxu0 0.0
  %696 = vmatprep.subr.mxu0 0.0
  %697 = vmatpush1.msra.mxu0 0.0
  %698 = vmatprep.subr.mxu0 0.0
  %699 = vmatpush1.msra.mxu0 0.0
  %700 = vmatprep.subr.mxu0 0.0
  %701 = vmatpush1.msra.mxu0 0.0
  %702 = vmatprep.subr.mxu0 0.0
  %703 = vmatpush1.msra.mxu0 0.0
  %704 = vmatprep.subr.mxu0 0.0
  %705 = vmatpush1.msra.mxu0 0.0
  %706 = vmatprep.subr.mxu0 0.0
  %707 = vmatpush1.msra.mxu0 0.0
  %708 = vmatprep.subr.mxu0 0.0
  %709 = vmatpush1.msra.mxu0 0.0
  %710 = vmatprep.subr.mxu0 0.0
  %711 = vmatpush1.msra.mxu0 0.0
  %712 = vmatprep.subr.mxu0 0.0
  %713 = vmatpush1.msra.mxu0 0.0
  %714 = vmatprep.subr.mxu0 0.0
  %715 = vmatpush1.msra.mxu0 0.0
  %716 = vmatprep.subr.mxu0 0.0
  %717 = vmatpush1.msra.mxu0 0.0
  %718 = vmatprep.subr.mxu0 0.0
  %719 = vmatpush1.msra.mxu0 0.0
  %720 = vmatprep.subr.mxu0 0.0
  %721 = vmatpush1.msra.mxu0 0.0
  %722 = vmatprep.subr.mxu0 0.0
  %723 = vmatpush1.msra.mxu0 0.0
  %724 = vmatprep.subr.mxu0 0.0
  %725 = vmatpush1.msra.mxu0 0.0
  %726 = vmatprep.subr.mxu0 0.0
  %727 = vmatpush1.msra.mxu0 0.0
  %728 = vmatprep.subr.mxu0 0.0
  %729 = vmatpush1.msra.mxu0 0.0
  %730 = vmatprep.subr.mxu0 0.0
  %731 = vmatpush1.msra.mxu0 0.0
  %732 = vmatprep.subr.mxu0 0.0
  %733 = vmatpush1.msra.mxu0 0.0
  %734 = vmatprep.subr.mxu0 0.0
  %735 = vmatpush1.msra.mxu0 0.0
  %736 = vmatprep.mubr.f32.mxu0 0.0
  %737 = vmatmul.mubr.f32.gmra.mrb[0].mxu0 %v670
  %v738 = vpop.f32.mrb[0].mxu0
  %v739 = vadd.f32 %v38, %v738
  %v740 = vpop.f32.mrb[0].mxu0
  %v741 = vadd.f32 %v42, %v740
  %742 = vdwg.mxu0
  %v745 = vcombine.low %v739, %v741
  %v747 = vunpack.c.l.s4 1983009808
  %v748 = vunpack.c.0.s8 %v747
  %v749 = vlaneseq
  %v750 = vshrl.u32 %v749, 7
  %v751 = vsub.s32 %v748, %v750
  %v752 = vrot.slane %v745, %v751
  %s754 = scalar_lea.vmem [#allocation2], 28
  %755 = vst [vmem:[%s754] sm:$0xf] %v752
  %v756 = vld [vmem:[%s2] sm:$0xff]
  %v757 = vld [vmem:[%s2 + $0x8] sm:$0xff]
  %v758 = vld [vmem:[%s2 + $0x10] sm:$0xff]
  %v759 = vld [vmem:[%s2 + $0x18] sm:$0xff]
  %v760 = vld [vmem:[%s2 + $0x20] sm:$0xff]
  %v761 = vld [vmem:[%s2 + $0x28] sm:$0xff]
  %v762 = vld [vmem:[%s2 + $0x30] sm:$0xff]
  %v763 = vld [vmem:[%s2 + $0x38] sm:$0xff]
  %v764 = vld [vmem:[%s2 + $0x40] sm:$0xff]
  %v765 = vld [vmem:[%s2 + $0x48] sm:$0xff]
  %v766 = vld [vmem:[%s2 + $0x50] sm:$0xff]
  %v767 = vld [vmem:[%s2 + $0x58] sm:$0xff]
  %v768 = vld [vmem:[%s2 + $0x60] sm:$0xff]
  %v769 = vld [vmem:[%s2 + $0x68] sm:$0xff]
  %v770 = vld [vmem:[%s2 + $0x70] sm:$0xff]
  %v771 = vld [vmem:[%s2 + $0x78] sm:$0xff]
  %v772 = vld [vmem:[#allocation2] sm:$0xf]
  %vm773 = vcmask 523264
  %v775 = vsel %vm773, 0.0, 0
  %777 = vmatprep.subr.mxu0 %v757
  %778 = vmatpush1.msra.mxu0 %v756
  %779 = vmatprep.subr.mxu0 %v759
  %780 = vmatpush1.msra.mxu0 %v758
  %781 = vmatprep.subr.mxu0 %v761
  %782 = vmatpush1.msra.mxu0 %v760
  %783 = vmatprep.subr.mxu0 %v763
  %784 = vmatpush1.msra.mxu0 %v762
  %785 = vmatprep.subr.mxu0 %v765
  %786 = vmatpush1.msra.mxu0 %v764
  %787 = vmatprep.subr.mxu0 %v767
  %788 = vmatpush1.msra.mxu0 %v766
  %789 = vmatprep.subr.mxu0 %v769
  %790 = vmatpush1.msra.mxu0 %v768
  %791 = vmatprep.subr.mxu0 %v771
  %792 = vmatpush1.msra.mxu0 %v770
  %793 = vmatprep.subr.mxu0 0.0
  %794 = vmatpush1.msra.mxu0 0.0
  %795 = vmatprep.subr.mxu0 0.0
  %796 = vmatpush1.msra.mxu0 0.0
  %797 = vmatprep.subr.mxu0 0.0
  %798 = vmatpush1.msra.mxu0 0.0
  %799 = vmatprep.subr.mxu0 0.0
  %800 = vmatpush1.msra.mxu0 0.0
  %801 = vmatprep.subr.mxu0 0.0
  %802 = vmatpush1.msra.mxu0 0.0
  %803 = vmatprep.subr.mxu0 0.0
  %804 = vmatpush1.msra.mxu0 0.0
  %805 = vmatprep.subr.mxu0 0.0
  %806 = vmatpush1.msra.mxu0 0.0
  %807 = vmatprep.subr.mxu0 0.0
  %808 = vmatpush1.msra.mxu0 0.0
  %809 = vmatprep.subr.mxu0 0.0
  %810 = vmatpush1.msra.mxu0 0.0
  %811 = vmatprep.subr.mxu0 0.0
  %812 = vmatpush1.msra.mxu0 0.0
  %813 = vmatprep.subr.mxu0 0.0
  %814 = vmatpush1.msra.mxu0 0.0
  %815 = vmatprep.subr.mxu0 0.0
  %816 = vmatpush1.msra.mxu0 0.0
  %817 = vmatprep.subr.mxu0 0.0
  %818 = vmatpush1.msra.mxu0 0.0
  %819 = vmatprep.subr.mxu0 0.0
  %820 = vmatpush1.msra.mxu0 0.0
  %821 = vmatprep.subr.mxu0 0.0
  %822 = vmatpush1.msra.mxu0 0.0
  %823 = vmatprep.subr.mxu0 0.0
  %824 = vmatpush1.msra.mxu0 0.0
  %825 = vmatprep.subr.mxu0 0.0
  %826 = vmatpush1.msra.mxu0 0.0
  %827 = vmatprep.subr.mxu0 0.0
  %828 = vmatpush1.msra.mxu0 0.0
  %829 = vmatprep.subr.mxu0 0.0
  %830 = vmatpush1.msra.mxu0 0.0
  %831 = vmatprep.subr.mxu0 0.0
  %832 = vmatpush1.msra.mxu0 0.0
  %833 = vmatprep.subr.mxu0 0.0
  %834 = vmatpush1.msra.mxu0 0.0
  %835 = vmatprep.subr.mxu0 0.0
  %836 = vmatpush1.msra.mxu0 0.0
  %837 = vmatprep.subr.mxu0 0.0
  %838 = vmatpush1.msra.mxu0 0.0
  %839 = vmatprep.subr.mxu0 0.0
  %840 = vmatpush1.msra.mxu0 0.0
  %841 = vmatprep.mubr.f32.mxu0 0.0
  %842 = vmatmul.mubr.f32.gmra.mrb[0].mxu0 %v775
  %v843 = vpop.f32.mrb[0].mxu0
  %v844 = vadd.f32 0.0, %v843
  %v845 = vpop.f32.mrb[0].mxu0
  %v846 = vadd.f32 0.0, %v845
  %847 = vdwg.mxu0
  %v850 = vcombine.low %v844, %v846
  %v852 = vunpack.c.l.s4 1983009808
  %v853 = vunpack.c.0.s8 %v852
  %v854 = vlaneseq
  %v855 = vshrl.u32 %v854, 7
  %v856 = vsub.s32 %v853, %v855
  %v857 = vrot.slane %v850, %v856
  %v859 = vadd.f32 %v772, %v857
  %v860 = vxor.u32 %v859, 2147483648
  %v861 = vmul.f32 %v860, 1.442695
  %v862 = vpow.pop %v861
  %v863 = vadd.f32 %v862, 1.0
  %v864 = vrcp.pop %v863
  %v865 = vmul.f32 1.0, %v864
  %867 = vrot.lane.b32.xlu0 %v859, 64
  %v868 = vpop.permute.xlu0 %867
  %v869 = vrot.slane %v868, 2
  %v871 = vtanh.pop %v869
  %v872 = vmul.f32 %v865, 0.0
  %v873 = vmul.f32 %v865, %v871
  %875 = vrot.lane.b32.xlu0 %v873, 64
  %v876 = vpop.permute.xlu0 %875
  %v878 = vadd.f32 %v872, %v876
  %v879 = vtanh.pop %v878
  %v881 = vrot.slane %v865, 2
  %884 = vrot.lane.b32.xlu0 %v879, 64
  %v885 = vpop.permute.xlu0 %884
  %v887 = vmul.f32 %v881, %v885
  %v888 = vld [vmem:[%s220] sm:$0xf]
  %v890 = vsel %vm773, %v887, 0
  %892 = vmatprep.subr.mxu0 %v757
  %893 = vmatpush1.msra.mxu0 %v756
  %894 = vmatprep.subr.mxu0 %v759
  %895 = vmatpush1.msra.mxu0 %v758
  %896 = vmatprep.subr.mxu0 %v761
  %897 = vmatpush1.msra.mxu0 %v760
  %898 = vmatprep.subr.mxu0 %v763
  %899 = vmatpush1.msra.mxu0 %v762
  %900 = vmatprep.subr.mxu0 %v765
  %901 = vmatpush1.msra.mxu0 %v764
  %902 = vmatprep.subr.mxu0 %v767
  %903 = vmatpush1.msra.mxu0 %v766
  %904 = vmatprep.subr.mxu0 %v769
  %905 = vmatpush1.msra.mxu0 %v768
  %906 = vmatprep.subr.mxu0 %v771
  %907 = vmatpush1.msra.mxu0 %v770
  %908 = vmatprep.subr.mxu0 0.0
  %909 = vmatpush1.msra.mxu0 0.0
  %910 = vmatprep.subr.mxu0 0.0
  %911 = vmatpush1.msra.mxu0 0.0
  %912 = vmatprep.subr.mxu0 0.0
  %913 = vmatpush1.msra.mxu0 0.0
  %914 = vmatprep.subr.mxu0 0.0
  %915 = vmatpush1.msra.mxu0 0.0
  %916 = vmatprep.subr.mxu0 0.0
  %917 = vmatpush1.msra.mxu0 0.0
  %918 = vmatprep.subr.mxu0 0.0
  %919 = vmatpush1.msra.mxu0 0.0
  %920 = vmatprep.subr.mxu0 0.0
  %921 = vmatpush1.msra.mxu0 0.0
  %922 = vmatprep.subr.mxu0 0.0
  %923 = vmatpush1.msra.mxu0 0.0
  %924 = vmatprep.subr.mxu0 0.0
  %925 = vmatpush1.msra.mxu0 0.0
  %926 = vmatprep.subr.mxu0 0.0
  %927 = vmatpush1.msra.mxu0 0.0
  %928 = vmatprep.subr.mxu0 0.0
  %929 = vmatpush1.msra.mxu0 0.0
  %930 = vmatprep.subr.mxu0 0.0
  %931 = vmatpush1.msra.mxu0 0.0
  %932 = vmatprep.subr.mxu0 0.0
  %933 = vmatpush1.msra.mxu0 0.0
  %934 = vmatprep.subr.mxu0 0.0
  %935 = vmatpush1.msra.mxu0 0.0
  %936 = vmatprep.subr.mxu0 0.0
  %937 = vmatpush1.msra.mxu0 0.0
  %938 = vmatprep.subr.mxu0 0.0
  %939 = vmatpush1.msra.mxu0 0.0
  %940 = vmatprep.subr.mxu0 0.0
  %941 = vmatpush1.msra.mxu0 0.0
  %942 = vmatprep.subr.mxu0 0.0
  %943 = vmatpush1.msra.mxu0 0.0
  %944 = vmatprep.subr.mxu0 0.0
  %945 = vmatpush1.msra.mxu0 0.0
  %946 = vmatprep.subr.mxu0 0.0
  %947 = vmatpush1.msra.mxu0 0.0
  %948 = vmatprep.subr.mxu0 0.0
  %949 = vmatpush1.msra.mxu0 0.0
  %950 = vmatprep.subr.mxu0 0.0
  %951 = vmatpush1.msra.mxu0 0.0
  %952 = vmatprep.subr.mxu0 0.0
  %953 = vmatpush1.msra.mxu0 0.0
  %954 = vmatprep.subr.mxu0 0.0
  %955 = vmatpush1.msra.mxu0 0.0
  %956 = vmatprep.mubr.f32.mxu0 0.0
  %957 = vmatmul.mubr.f32.gmra.mrb[0].mxu0 %v890
  %v958 = vpop.f32.mrb[0].mxu0
  %v959 = vadd.f32 0.0, %v958
  %v960 = vpop.f32.mrb[0].mxu0
  %v961 = vadd.f32 0.0, %v960
  %962 = vdwg.mxu0
  %v965 = vcombine.low %v959, %v961
  %v967 = vunpack.c.l.s4 1983009808
  %v968 = vunpack.c.0.s8 %v967
  %v969 = vlaneseq
  %v970 = vshrl.u32 %v969, 7
  %v971 = vsub.s32 %v968, %v970
  %v972 = vrot.slane %v965, %v971
  %v974 = vadd.f32 %v888, %v972
  %v975 = vxor.u32 %v974, 2147483648
  %v976 = vmul.f32 %v975, 1.442695
  %v977 = vpow.pop %v976
  %v978 = vadd.f32 %v977, 1.0
  %v979 = vrcp.pop %v978
  %v980 = vmul.f32 1.0, %v979
  %982 = vrot.lane.b32.xlu0 %v974, 64
  %v983 = vpop.permute.xlu0 %982
  %v984 = vrot.slane %v983, 2
  %v986 = vtanh.pop %v984
  %v987 = vmul.f32 %v980, %v878
  %v988 = vmul.f32 %v980, %v986
  %990 = vrot.lane.b32.xlu0 %v988, 64
  %v991 = vpop.permute.xlu0 %990
  %v993 = vadd.f32 %v987, %v991
  %v994 = vtanh.pop %v993
  %v996 = vrot.slane %v980, 2
  %999 = vrot.lane.b32.xlu0 %v994, 64
  %v1000 = vpop.permute.xlu0 %999
  %v1002 = vmul.f32 %v996, %v1000
  %v1003 = vld [vmem:[%s309] sm:$0xf]
  %v1005 = vsel %vm773, %v1002, 0
  %1007 = vmatprep.subr.mxu0 %v757
  %1008 = vmatpush1.msra.mxu0 %v756
  %1009 = vmatprep.subr.mxu0 %v759
  %1010 = vmatpush1.msra.mxu0 %v758
  %1011 = vmatprep.subr.mxu0 %v761
  %1012 = vmatpush1.msra.mxu0 %v760
  %1013 = vmatprep.subr.mxu0 %v763
  %1014 = vmatpush1.msra.mxu0 %v762
  %1015 = vmatprep.subr.mxu0 %v765
  %1016 = vmatpush1.msra.mxu0 %v764
  %1017 = vmatprep.subr.mxu0 %v767
  %1018 = vmatpush1.msra.mxu0 %v766
  %1019 = vmatprep.subr.mxu0 %v769
  %1020 = vmatpush1.msra.mxu0 %v768
  %1021 = vmatprep.subr.mxu0 %v771
  %1022 = vmatpush1.msra.mxu0 %v770
  %1023 = vmatprep.subr.mxu0 0.0
  %1024 = vmatpush1.msra.mxu0 0.0
  %1025 = vmatprep.subr.mxu0 0.0
  %1026 = vmatpush1.msra.mxu0 0.0
  %1027 = vmatprep.subr.mxu0 0.0
  %1028 = vmatpush1.msra.mxu0 0.0
  %1029 = vmatprep.subr.mxu0 0.0
  %1030 = vmatpush1.msra.mxu0 0.0
  %1031 = vmatprep.subr.mxu0 0.0
  %1032 = vmatpush1.msra.mxu0 0.0
  %1033 = vmatprep.subr.mxu0 0.0
  %1034 = vmatpush1.msra.mxu0 0.0
  %1035 = vmatprep.subr.mxu0 0.0
  %1036 = vmatpush1.msra.mxu0 0.0
  %1037 = vmatprep.subr.mxu0 0.0
  %1038 = vmatpush1.msra.mxu0 0.0
  %1039 = vmatprep.subr.mxu0 0.0
  %1040 = vmatpush1.msra.mxu0 0.0
  %1041 = vmatprep.subr.mxu0 0.0
  %1042 = vmatpush1.msra.mxu0 0.0
  %1043 = vmatprep.subr.mxu0 0.0
  %1044 = vmatpush1.msra.mxu0 0.0
  %1045 = vmatprep.subr.mxu0 0.0
  %1046 = vmatpush1.msra.mxu0 0.0
  %1047 = vmatprep.subr.mxu0 0.0
  %1048 = vmatpush1.msra.mxu0 0.0
  %1049 = vmatprep.subr.mxu0 0.0
  %1050 = vmatpush1.msra.mxu0 0.0
  %1051 = vmatprep.subr.mxu0 0.0
  %1052 = vmatpush1.msra.mxu0 0.0
  %1053 = vmatprep.subr.mxu0 0.0
  %1054 = vmatpush1.msra.mxu0 0.0
  %1055 = vmatprep.subr.mxu0 0.0
  %1056 = vmatpush1.msra.mxu0 0.0
  %1057 = vmatprep.subr.mxu0 0.0
  %1058 = vmatpush1.msra.mxu0 0.0
  %1059 = vmatprep.subr.mxu0 0.0
  %1060 = vmatpush1.msra.mxu0 0.0
  %1061 = vmatprep.subr.mxu0 0.0
  %1062 = vmatpush1.msra.mxu0 0.0
  %1063 = vmatprep.subr.mxu0 0.0
  %1064 = vmatpush1.msra.mxu0 0.0
  %1065 = vmatprep.subr.mxu0 0.0
  %1066 = vmatpush1.msra.mxu0 0.0
  %1067 = vmatprep.subr.mxu0 0.0
  %1068 = vmatpush1.msra.mxu0 0.0
  %1069 = vmatprep.subr.mxu0 0.0
  %1070 = vmatpush1.msra.mxu0 0.0
  %1071 = vmatprep.mubr.f32.mxu0 0.0
  %1072 = vmatmul.mubr.f32.gmra.mrb[0].mxu0 %v1005
  %v1073 = vpop.f32.mrb[0].mxu0
  %v1074 = vadd.f32 0.0, %v1073
  %v1075 = vpop.f32.mrb[0].mxu0
  %v1076 = vadd.f32 0.0, %v1075
  %1077 = vdwg.mxu0
  %v1080 = vcombine.low %v1074, %v1076
  %v1082 = vunpack.c.l.s4 1983009808
  %v1083 = vunpack.c.0.s8 %v1082
  %v1084 = vlaneseq
  %v1085 = vshrl.u32 %v1084, 7
  %v1086 = vsub.s32 %v1083, %v1085
  %v1087 = vrot.slane %v1080, %v1086
  %v1089 = vadd.f32 %v1003, %v1087
  %v1090 = vxor.u32 %v1089, 2147483648
  %v1091 = vmul.f32 %v1090, 1.442695
  %v1092 = vpow.pop %v1091
  %v1093 = vadd.f32 %v1092, 1.0
  %v1094 = vrcp.pop %v1093
  %v1095 = vmul.f32 1.0, %v1094
  %1097 = vrot.lane.b32.xlu0 %v1089, 64
  %v1098 = vpop.permute.xlu0 %1097
  %v1099 = vrot.slane %v1098, 2
  %v1101 = vtanh.pop %v1099
  %v1102 = vmul.f32 %v1095, %v993
  %v1103 = vmul.f32 %v1095, %v1101
  %1105 = vrot.lane.b32.xlu0 %v1103, 64
  %v1106 = vpop.permute.xlu0 %1105
  %v1108 = vadd.f32 %v1102, %v1106
  %v1109 = vtanh.pop %v1108
  %v1111 = vrot.slane %v1095, 2
  %1114 = vrot.lane.b32.xlu0 %v1109, 64
  %v1115 = vpop.permute.xlu0 %1114
  %v1117 = vmul.f32 %v1111, %v1115
  %v1118 = vld [vmem:[%s398] sm:$0xf]
  %v1120 = vsel %vm773, %v1117, 0
  %1122 = vmatprep.subr.mxu0 %v757
  %1123 = vmatpush1.msra.mxu0 %v756
  %1124 = vmatprep.subr.mxu0 %v759
  %1125 = vmatpush1.msra.mxu0 %v758
  %1126 = vmatprep.subr.mxu0 %v761
  %1127 = vmatpush1.msra.mxu0 %v760
  %1128 = vmatprep.subr.mxu0 %v763
  %1129 = vmatpush1.msra.mxu0 %v762
  %1130 = vmatprep.subr.mxu0 %v765
  %1131 = vmatpush1.msra.mxu0 %v764
  %1132 = vmatprep.subr.mxu0 %v767
  %1133 = vmatpush1.msra.mxu0 %v766
  %1134 = vmatprep.subr.mxu0 %v769
  %1135 = vmatpush1.msra.mxu0 %v768
  %1136 = vmatprep.subr.mxu0 %v771
  %1137 = vmatpush1.msra.mxu0 %v770
  %1138 = vmatprep.subr.mxu0 0.0
  %1139 = vmatpush1.msra.mxu0 0.0
  %1140 = vmatprep.subr.mxu0 0.0
  %1141 = vmatpush1.msra.mxu0 0.0
  %1142 = vmatprep.subr.mxu0 0.0
  %1143 = vmatpush1.msra.mxu0 0.0
  %1144 = vmatprep.subr.mxu0 0.0
  %1145 = vmatpush1.msra.mxu0 0.0
  %1146 = vmatprep.subr.mxu0 0.0
  %1147 = vmatpush1.msra.mxu0 0.0
  %1148 = vmatprep.subr.mxu0 0.0
  %1149 = vmatpush1.msra.mxu0 0.0
  %1150 = vmatprep.subr.mxu0 0.0
  %1151 = vmatpush1.msra.mxu0 0.0
  %1152 = vmatprep.subr.mxu0 0.0
  %1153 = vmatpush1.msra.mxu0 0.0
  %1154 = vmatprep.subr.mxu0 0.0
  %1155 = vmatpush1.msra.mxu0 0.0
  %1156 = vmatprep.subr.mxu0 0.0
  %1157 = vmatpush1.msra.mxu0 0.0
  %1158 = vmatprep.subr.mxu0 0.0
  %1159 = vmatpush1.msra.mxu0 0.0
  %1160 = vmatprep.subr.mxu0 0.0
  %1161 = vmatpush1.msra.mxu0 0.0
  %1162 = vmatprep.subr.mxu0 0.0
  %1163 = vmatpush1.msra.mxu0 0.0
  %1164 = vmatprep.subr.mxu0 0.0
  %1165 = vmatpush1.msra.mxu0 0.0
  %1166 = vmatprep.subr.mxu0 0.0
  %1167 = vmatpush1.msra.mxu0 0.0
  %1168 = vmatprep.subr.mxu0 0.0
  %1169 = vmatpush1.msra.mxu0 0.0
  %1170 = vmatprep.subr.mxu0 0.0
  %1171 = vmatpush1.msra.mxu0 0.0
  %1172 = vmatprep.subr.mxu0 0.0
  %1173 = vmatpush1.msra.mxu0 0.0
  %1174 = vmatprep.subr.mxu0 0.0
  %1175 = vmatpush1.msra.mxu0 0.0
  %1176 = vmatprep.subr.mxu0 0.0
  %1177 = vmatpush1.msra.mxu0 0.0
  %1178 = vmatprep.subr.mxu0 0.0
  %1179 = vmatpush1.msra.mxu0 0.0
  %1180 = vmatprep.subr.mxu0 0.0
  %1181 = vmatpush1.msra.mxu0 0.0
  %1182 = vmatprep.subr.mxu0 0.0
  %1183 = vmatpush1.msra.mxu0 0.0
  %1184 = vmatprep.subr.mxu0 0.0
  %1185 = vmatpush1.msra.mxu0 0.0
  %1186 = vmatprep.mubr.f32.mxu0 0.0
  %1187 = vmatmul.mubr.f32.gmra.mrb[0].mxu0 %v1120
  %v1188 = vpop.f32.mrb[0].mxu0
  %v1189 = vadd.f32 0.0, %v1188
  %v1190 = vpop.f32.mrb[0].mxu0
  %v1191 = vadd.f32 0.0, %v1190
  %1192 = vdwg.mxu0
  %v1195 = vcombine.low %v1189, %v1191
  %v1197 = vunpack.c.l.s4 1983009808
  %v1198 = vunpack.c.0.s8 %v1197
  %v1199 = vlaneseq
  %v1200 = vshrl.u32 %v1199, 7
  %v1201 = vsub.s32 %v1198, %v1200
  %v1202 = vrot.slane %v1195, %v1201
  %v1204 = vadd.f32 %v1118, %v1202
  %v1205 = vxor.u32 %v1204, 2147483648
  %v1206 = vmul.f32 %v1205, 1.442695
  %v1207 = vpow.pop %v1206
  %v1208 = vadd.f32 %v1207, 1.0
  %v1209 = vrcp.pop %v1208
  %v1210 = vmul.f32 1.0, %v1209
  %1212 = vrot.lane.b32.xlu0 %v1204, 64
  %v1213 = vpop.permute.xlu0 %1212
  %v1214 = vrot.slane %v1213, 2
  %v1216 = vtanh.pop %v1214
  %v1217 = vmul.f32 %v1210, %v1108
  %v1218 = vmul.f32 %v1210, %v1216
  %1220 = vrot.lane.b32.xlu0 %v1218, 64
  %v1221 = vpop.permute.xlu0 %1220
  %v1223 = vadd.f32 %v1217, %v1221
  %v1224 = vtanh.pop %v1223
  %v1226 = vrot.slane %v1210, 2
  %1229 = vrot.lane.b32.xlu0 %v1224, 64
  %v1230 = vpop.permute.xlu0 %1229
  %v1232 = vmul.f32 %v1226, %v1230
  %v1233 = vld [vmem:[%s487] sm:$0xf]
  %v1235 = vsel %vm773, %v1232, 0
  %1237 = vmatprep.subr.mxu0 %v757
  %1238 = vmatpush1.msra.mxu0 %v756
  %1239 = vmatprep.subr.mxu0 %v759
  %1240 = vmatpush1.msra.mxu0 %v758
  %1241 = vmatprep.subr.mxu0 %v761
  %1242 = vmatpush1.msra.mxu0 %v760
  %1243 = vmatprep.subr.mxu0 %v763
  %1244 = vmatpush1.msra.mxu0 %v762
  %1245 = vmatprep.subr.mxu0 %v765
  %1246 = vmatpush1.msra.mxu0 %v764
  %1247 = vmatprep.subr.mxu0 %v767
  %1248 = vmatpush1.msra.mxu0 %v766
  %1249 = vmatprep.subr.mxu0 %v769
  %1250 = vmatpush1.msra.mxu0 %v768
  %1251 = vmatprep.subr.mxu0 %v771
  %1252 = vmatpush1.msra.mxu0 %v770
  %1253 = vmatprep.subr.mxu0 0.0
  %1254 = vmatpush1.msra.mxu0 0.0
  %1255 = vmatprep.subr.mxu0 0.0
  %1256 = vmatpush1.msra.mxu0 0.0
  %1257 = vmatprep.subr.mxu0 0.0
  %1258 = vmatpush1.msra.mxu0 0.0
  %1259 = vmatprep.subr.mxu0 0.0
  %1260 = vmatpush1.msra.mxu0 0.0
  %1261 = vmatprep.subr.mxu0 0.0
  %1262 = vmatpush1.msra.mxu0 0.0
  %1263 = vmatprep.subr.mxu0 0.0
  %1264 = vmatpush1.msra.mxu0 0.0
  %1265 = vmatprep.subr.mxu0 0.0
  %1266 = vmatpush1.msra.mxu0 0.0
  %1267 = vmatprep.subr.mxu0 0.0
  %1268 = vmatpush1.msra.mxu0 0.0
  %1269 = vmatprep.subr.mxu0 0.0
  %1270 = vmatpush1.msra.mxu0 0.0
  %1271 = vmatprep.subr.mxu0 0.0
  %1272 = vmatpush1.msra.mxu0 0.0
  %1273 = vmatprep.subr.mxu0 0.0
  %1274 = vmatpush1.msra.mxu0 0.0
  %1275 = vmatprep.subr.mxu0 0.0
  %1276 = vmatpush1.msra.mxu0 0.0
  %1277 = vmatprep.subr.mxu0 0.0
  %1278 = vmatpush1.msra.mxu0 0.0
  %1279 = vmatprep.subr.mxu0 0.0
  %1280 = vmatpush1.msra.mxu0 0.0
  %1281 = vmatprep.subr.mxu0 0.0
  %1282 = vmatpush1.msra.mxu0 0.0
  %1283 = vmatprep.subr.mxu0 0.0
  %1284 = vmatpush1.msra.mxu0 0.0
  %1285 = vmatprep.subr.mxu0 0.0
  %1286 = vmatpush1.msra.mxu0 0.0
  %1287 = vmatprep.subr.mxu0 0.0
  %1288 = vmatpush1.msra.mxu0 0.0
  %1289 = vmatprep.subr.mxu0 0.0
  %1290 = vmatpush1.msra.mxu0 0.0
  %1291 = vmatprep.subr.mxu0 0.0
  %1292 = vmatpush1.msra.mxu0 0.0
  %1293 = vmatprep.subr.mxu0 0.0
  %1294 = vmatpush1.msra.mxu0 0.0
  %1295 = vmatprep.subr.mxu0 0.0
  %1296 = vmatpush1.msra.mxu0 0.0
  %1297 = vmatprep.subr.mxu0 0.0
  %1298 = vmatpush1.msra.mxu0 0.0
  %1299 = vmatprep.subr.mxu0 0.0
  %1300 = vmatpush1.msra.mxu0 0.0
  %1301 = vmatprep.mubr.f32.mxu0 0.0
  %1302 = vmatmul.mubr.f32.gmra.mrb[0].mxu0 %v1235
  %v1303 = vpop.f32.mrb[0].mxu0
  %v1304 = vadd.f32 0.0, %v1303
  %v1305 = vpop.f32.mrb[0].mxu0
  %v1306 = vadd.f32 0.0, %v1305
  %1307 = vdwg.mxu0
  %v1310 = vcombine.low %v1304, %v1306
  %v1312 = vunpack.c.l.s4 1983009808
  %v1313 = vunpack.c.0.s8 %v1312
  %v1314 = vlaneseq
  %v1315 = vshrl.u32 %v1314, 7
  %v1316 = vsub.s32 %v1313, %v1315
  %v1317 = vrot.slane %v1310, %v1316
  %v1319 = vadd.f32 %v1233, %v1317
  %v1320 = vxor.u32 %v1319, 2147483648
  %v1321 = vmul.f32 %v1320, 1.442695
  %v1322 = vpow.pop %v1321
  %v1323 = vadd.f32 %v1322, 1.0
  %v1324 = vrcp.pop %v1323
  %v1325 = vmul.f32 1.0, %v1324
  %1327 = vrot.lane.b32.xlu0 %v1319, 64
  %v1328 = vpop.permute.xlu0 %1327
  %v1329 = vrot.slane %v1328, 2
  %v1331 = vtanh.pop %v1329
  %v1332 = vmul.f32 %v1325, %v1223
  %v1333 = vmul.f32 %v1325, %v1331
  %1335 = vrot.lane.b32.xlu0 %v1333, 64
  %v1336 = vpop.permute.xlu0 %1335
  %v1338 = vadd.f32 %v1332, %v1336
  %v1339 = vtanh.pop %v1338
  %v1341 = vrot.slane %v1325, 2
  %1344 = vrot.lane.b32.xlu0 %v1339, 64
  %v1345 = vpop.permute.xlu0 %1344
  %v1347 = vmul.f32 %v1341, %v1345
  %v1348 = vld [vmem:[%s576] sm:$0xf]
  %v1350 = vsel %vm773, %v1347, 0
  %1352 = vmatprep.subr.mxu0 %v757
  %1353 = vmatpush1.msra.mxu0 %v756
  %1354 = vmatprep.subr.mxu0 %v759
  %1355 = vmatpush1.msra.mxu0 %v758
  %1356 = vmatprep.subr.mxu0 %v761
  %1357 = vmatpush1.msra.mxu0 %v760
  %1358 = vmatprep.subr.mxu0 %v763
  %1359 = vmatpush1.msra.mxu0 %v762
  %1360 = vmatprep.subr.mxu0 %v765
  %1361 = vmatpush1.msra.mxu0 %v764
  %1362 = vmatprep.subr.mxu0 %v767
  %1363 = vmatpush1.msra.mxu0 %v766
  %1364 = vmatprep.subr.mxu0 %v769
  %1365 = vmatpush1.msra.mxu0 %v768
  %1366 = vmatprep.subr.mxu0 %v771
  %1367 = vmatpush1.msra.mxu0 %v770
  %1368 = vmatprep.subr.mxu0 0.0
  %1369 = vmatpush1.msra.mxu0 0.0
  %1370 = vmatprep.subr.mxu0 0.0
  %1371 = vmatpush1.msra.mxu0 0.0
  %1372 = vmatprep.subr.mxu0 0.0
  %1373 = vmatpush1.msra.mxu0 0.0
  %1374 = vmatprep.subr.mxu0 0.0
  %1375 = vmatpush1.msra.mxu0 0.0
  %1376 = vmatprep.subr.mxu0 0.0
  %1377 = vmatpush1.msra.mxu0 0.0
  %1378 = vmatprep.subr.mxu0 0.0
  %1379 = vmatpush1.msra.mxu0 0.0
  %1380 = vmatprep.subr.mxu0 0.0
  %1381 = vmatpush1.msra.mxu0 0.0
  %1382 = vmatprep.subr.mxu0 0.0
  %1383 = vmatpush1.msra.mxu0 0.0
  %1384 = vmatprep.subr.mxu0 0.0
  %1385 = vmatpush1.msra.mxu0 0.0
  %1386 = vmatprep.subr.mxu0 0.0
  %1387 = vmatpush1.msra.mxu0 0.0
  %1388 = vmatprep.subr.mxu0 0.0
  %1389 = vmatpush1.msra.mxu0 0.0
  %1390 = vmatprep.subr.mxu0 0.0
  %1391 = vmatpush1.msra.mxu0 0.0
  %1392 = vmatprep.subr.mxu0 0.0
  %1393 = vmatpush1.msra.mxu0 0.0
  %1394 = vmatprep.subr.mxu0 0.0
  %1395 = vmatpush1.msra.mxu0 0.0
  %1396 = vmatprep.subr.mxu0 0.0
  %1397 = vmatpush1.msra.mxu0 0.0
  %1398 = vmatprep.subr.mxu0 0.0
  %1399 = vmatpush1.msra.mxu0 0.0
  %1400 = vmatprep.subr.mxu0 0.0
  %1401 = vmatpush1.msra.mxu0 0.0
  %1402 = vmatprep.subr.mxu0 0.0
  %1403 = vmatpush1.msra.mxu0 0.0
  %1404 = vmatprep.subr.mxu0 0.0
  %1405 = vmatpush1.msra.mxu0 0.0
  %1406 = vmatprep.subr.mxu0 0.0
  %1407 = vmatpush1.msra.mxu0 0.0
  %1408 = vmatprep.subr.mxu0 0.0
  %1409 = vmatpush1.msra.mxu0 0.0
  %1410 = vmatprep.subr.mxu0 0.0
  %1411 = vmatpush1.msra.mxu0 0.0
  %1412 = vmatprep.subr.mxu0 0.0
  %1413 = vmatpush1.msra.mxu0 0.0
  %1414 = vmatprep.subr.mxu0 0.0
  %1415 = vmatpush1.msra.mxu0 0.0
  %1416 = vmatprep.mubr.f32.mxu0 0.0
  %1417 = vmatmul.mubr.f32.gmra.mrb[0].mxu0 %v1350
  %v1418 = vpop.f32.mrb[0].mxu0
  %v1419 = vadd.f32 0.0, %v1418
  %v1420 = vpop.f32.mrb[0].mxu0
  %v1421 = vadd.f32 0.0, %v1420
  %1422 = vdwg.mxu0
  %v1425 = vcombine.low %v1419, %v1421
  %v1427 = vunpack.c.l.s4 1983009808
  %v1428 = vunpack.c.0.s8 %v1427
  %v1429 = vlaneseq
  %v1430 = vshrl.u32 %v1429, 7
  %v1431 = vsub.s32 %v1428, %v1430
  %v1432 = vrot.slane %v1425, %v1431
  %v1434 = vadd.f32 %v1348, %v1432
  %v1435 = vxor.u32 %v1434, 2147483648
  %v1436 = vmul.f32 %v1435, 1.442695
  %v1437 = vpow.pop %v1436
  %v1438 = vadd.f32 %v1437, 1.0
  %v1439 = vrcp.pop %v1438
  %v1440 = vmul.f32 1.0, %v1439
  %1442 = vrot.lane.b32.xlu0 %v1434, 64
  %v1443 = vpop.permute.xlu0 %1442
  %v1444 = vrot.slane %v1443, 2
  %v1446 = vtanh.pop %v1444
  %v1447 = vmul.f32 %v1440, %v1338
  %v1448 = vmul.f32 %v1440, %v1446
  %1450 = vrot.lane.b32.xlu0 %v1448, 64
  %v1451 = vpop.permute.xlu0 %1450
  %v1453 = vadd.f32 %v1447, %v1451
  %v1454 = vtanh.pop %v1453
  %v1456 = vrot.slane %v1440, 2
  %1459 = vrot.lane.b32.xlu0 %v1454, 64
  %v1460 = vpop.permute.xlu0 %1459
  %v1462 = vmul.f32 %v1456, %v1460
  %v1463 = vld [vmem:[%s665] sm:$0xf]
  %v1465 = vsel %vm773, %v1462, 0
  %1467 = vmatprep.subr.mxu0 %v757
  %1468 = vmatpush1.msra.mxu0 %v756
  %1469 = vmatprep.subr.mxu0 %v759
  %1470 = vmatpush1.msra.mxu0 %v758
  %1471 = vmatprep.subr.mxu0 %v761
  %1472 = vmatpush1.msra.mxu0 %v760
  %1473 = vmatprep.subr.mxu0 %v763
  %1474 = vmatpush1.msra.mxu0 %v762
  %1475 = vmatprep.subr.mxu0 %v765
  %1476 = vmatpush1.msra.mxu0 %v764
  %1477 = vmatprep.subr.mxu0 %v767
  %1478 = vmatpush1.msra.mxu0 %v766
  %1479 = vmatprep.subr.mxu0 %v769
  %1480 = vmatpush1.msra.mxu0 %v768
  %1481 = vmatprep.subr.mxu0 %v771
  %1482 = vmatpush1.msra.mxu0 %v770
  %1483 = vmatprep.subr.mxu0 0.0
  %1484 = vmatpush1.msra.mxu0 0.0
  %1485 = vmatprep.subr.mxu0 0.0
  %1486 = vmatpush1.msra.mxu0 0.0
  %1487 = vmatprep.subr.mxu0 0.0
  %1488 = vmatpush1.msra.mxu0 0.0
  %1489 = vmatprep.subr.mxu0 0.0
  %1490 = vmatpush1.msra.mxu0 0.0
  %1491 = vmatprep.subr.mxu0 0.0
  %1492 = vmatpush1.msra.mxu0 0.0
  %1493 = vmatprep.subr.mxu0 0.0
  %1494 = vmatpush1.msra.mxu0 0.0
  %1495 = vmatprep.subr.mxu0 0.0
  %1496 = vmatpush1.msra.mxu0 0.0
  %1497 = vmatprep.subr.mxu0 0.0
  %1498 = vmatpush1.msra.mxu0 0.0
  %1499 = vmatprep.subr.mxu0 0.0
  %1500 = vmatpush1.msra.mxu0 0.0
  %1501 = vmatprep.subr.mxu0 0.0
  %1502 = vmatpush1.msra.mxu0 0.0
  %1503 = vmatprep.subr.mxu0 0.0
  %1504 = vmatpush1.msra.mxu0 0.0
  %1505 = vmatprep.subr.mxu0 0.0
  %1506 = vmatpush1.msra.mxu0 0.0
  %1507 = vmatprep.subr.mxu0 0.0
  %1508 = vmatpush1.msra.mxu0 0.0
  %1509 = vmatprep.subr.mxu0 0.0
  %1510 = vmatpush1.msra.mxu0 0.0
  %1511 = vmatprep.subr.mxu0 0.0
  %1512 = vmatpush1.msra.mxu0 0.0
  %1513 = vmatprep.subr.mxu0 0.0
  %1514 = vmatpush1.msra.mxu0 0.0
  %1515 = vmatprep.subr.mxu0 0.0
  %1516 = vmatpush1.msra.mxu0 0.0
  %1517 = vmatprep.subr.mxu0 0.0
  %1518 = vmatpush1.msra.mxu0 0.0
  %1519 = vmatprep.subr.mxu0 0.0
  %1520 = vmatpush1.msra.mxu0 0.0
  %1521 = vmatprep.subr.mxu0 0.0
  %1522 = vmatpush1.msra.mxu0 0.0
  %1523 = vmatprep.subr.mxu0 0.0
  %1524 = vmatpush1.msra.mxu0 0.0
  %1525 = vmatprep.subr.mxu0 0.0
  %1526 = vmatpush1.msra.mxu0 0.0
  %1527 = vmatprep.subr.mxu0 0.0
  %1528 = vmatpush1.msra.mxu0 0.0
  %1529 = vmatprep.subr.mxu0 0.0
  %1530 = vmatpush1.msra.mxu0 0.0
  %1531 = vmatprep.mubr.f32.mxu0 0.0
  %1532 = vmatmul.mubr.f32.gmra.mrb[0].mxu0 %v1465
  %v1533 = vpop.f32.mrb[0].mxu0
  %v1534 = vadd.f32 0.0, %v1533
  %v1535 = vpop.f32.mrb[0].mxu0
  %v1536 = vadd.f32 0.0, %v1535
  %1537 = vdwg.mxu0
  %v1540 = vcombine.low %v1534, %v1536
  %v1542 = vunpack.c.l.s4 1983009808
  %v1543 = vunpack.c.0.s8 %v1542
  %v1544 = vlaneseq
  %v1545 = vshrl.u32 %v1544, 7
  %v1546 = vsub.s32 %v1543, %v1545
  %v1547 = vrot.slane %v1540, %v1546
  %v1549 = vadd.f32 %v1463, %v1547
  %v1550 = vxor.u32 %v1549, 2147483648
  %v1551 = vmul.f32 %v1550, 1.442695
  %v1552 = vpow.pop %v1551
  %v1553 = vadd.f32 %v1552, 1.0
  %v1554 = vrcp.pop %v1553
  %v1555 = vmul.f32 1.0, %v1554
  %1557 = vrot.lane.b32.xlu0 %v1549, 64
  %v1558 = vpop.permute.xlu0 %1557
  %v1559 = vrot.slane %v1558, 2
  %v1561 = vtanh.pop %v1559
  %v1562 = vmul.f32 %v1555, %v1453
  %v1563 = vmul.f32 %v1555, %v1561
  %1565 = vrot.lane.b32.xlu0 %v1563, 64
  %v1566 = vpop.permute.xlu0 %1565
  %v1568 = vadd.f32 %v1562, %v1566
  %v1569 = vtanh.pop %v1568
  %v1571 = vrot.slane %v1555, 2
  %1574 = vrot.lane.b32.xlu0 %v1569, 64
  %v1575 = vpop.permute.xlu0 %1574
  %v1577 = vmul.f32 %v1571, %v1575
  %v1578 = vld [vmem:[%s754] sm:$0xf]
  %v1580 = vsel %vm773, %v1577, 0
  %1582 = vmatprep.subr.mxu0 %v757
  %1583 = vmatpush1.msra.mxu0 %v756
  %1584 = vmatprep.subr.mxu0 %v759
  %1585 = vmatpush1.msra.mxu0 %v758
  %1586 = vmatprep.subr.mxu0 %v761
  %1587 = vmatpush1.msra.mxu0 %v760
  %1588 = vmatprep.subr.mxu0 %v763
  %1589 = vmatpush1.msra.mxu0 %v762
  %1590 = vmatprep.subr.mxu0 %v765
  %1591 = vmatpush1.msra.mxu0 %v764
  %1592 = vmatprep.subr.mxu0 %v767
  %1593 = vmatpush1.msra.mxu0 %v766
  %1594 = vmatprep.subr.mxu0 %v769
  %1595 = vmatpush1.msra.mxu0 %v768
  %1596 = vmatprep.subr.mxu0 %v771
  %1597 = vmatpush1.msra.mxu0 %v770
  %1598 = vmatprep.subr.mxu0 0.0
  %1599 = vmatpush1.msra.mxu0 0.0
  %1600 = vmatprep.subr.mxu0 0.0
  %1601 = vmatpush1.msra.mxu0 0.0
  %1602 = vmatprep.subr.mxu0 0.0
  %1603 = vmatpush1.msra.mxu0 0.0
  %1604 = vmatprep.subr.mxu0 0.0
  %1605 = vmatpush1.msra.mxu0 0.0
  %1606 = vmatprep.subr.mxu0 0.0
  %1607 = vmatpush1.msra.mxu0 0.0
  %1608 = vmatprep.subr.mxu0 0.0
  %1609 = vmatpush1.msra.mxu0 0.0
  %1610 = vmatprep.subr.mxu0 0.0
  %1611 = vmatpush1.msra.mxu0 0.0
  %1612 = vmatprep.subr.mxu0 0.0
  %1613 = vmatpush1.msra.mxu0 0.0
  %1614 = vmatprep.subr.mxu0 0.0
  %1615 = vmatpush1.msra.mxu0 0.0
  %1616 = vmatprep.subr.mxu0 0.0
  %1617 = vmatpush1.msra.mxu0 0.0
  %1618 = vmatprep.subr.mxu0 0.0
  %1619 = vmatpush1.msra.mxu0 0.0
  %1620 = vmatprep.subr.mxu0 0.0
  %1621 = vmatpush1.msra.mxu0 0.0
  %1622 = vmatprep.subr.mxu0 0.0
  %1623 = vmatpush1.msra.mxu0 0.0
  %1624 = vmatprep.subr.mxu0 0.0
  %1625 = vmatpush1.msra.mxu0 0.0
  %1626 = vmatprep.subr.mxu0 0.0
  %1627 = vmatpush1.msra.mxu0 0.0
  %1628 = vmatprep.subr.mxu0 0.0
  %1629 = vmatpush1.msra.mxu0 0.0
  %1630 = vmatprep.subr.mxu0 0.0
  %1631 = vmatpush1.msra.mxu0 0.0
  %1632 = vmatprep.subr.mxu0 0.0
  %1633 = vmatpush1.msra.mxu0 0.0
  %1634 = vmatprep.subr.mxu0 0.0
  %1635 = vmatpush1.msra.mxu0 0.0
  %1636 = vmatprep.subr.mxu0 0.0
  %1637 = vmatpush1.msra.mxu0 0.0
  %1638 = vmatprep.subr.mxu0 0.0
  %1639 = vmatpush1.msra.mxu0 0.0
  %1640 = vmatprep.subr.mxu0 0.0
  %1641 = vmatpush1.msra.mxu0 0.0
  %1642 = vmatprep.subr.mxu0 0.0
  %1643 = vmatpush1.msra.mxu0 0.0
  %1644 = vmatprep.subr.mxu0 0.0
  %1645 = vmatpush1.msra.mxu0 0.0
  %1646 = vmatprep.mubr.f32.mxu0 0.0
  %1647 = vmatmul.mubr.f32.gmra.mrb[0].mxu0 %v1580
  %v1648 = vpop.f32.mrb[0].mxu0
  %v1649 = vadd.f32 0.0, %v1648
  %v1650 = vpop.f32.mrb[0].mxu0
  %v1651 = vadd.f32 0.0, %v1650
  %1652 = vdwg.mxu0
  %v1655 = vcombine.low %v1649, %v1651
  %v1657 = vunpack.c.l.s4 1983009808
  %v1658 = vunpack.c.0.s8 %v1657
  %v1659 = vlaneseq
  %v1660 = vshrl.u32 %v1659, 7
  %v1661 = vsub.s32 %v1658, %v1660
  %v1662 = vrot.slane %v1655, %v1661
  %v1664 = vadd.f32 %v1578, %v1662
  %v1665 = vxor.u32 %v1664, 2147483648
  %v1666 = vmul.f32 %v1665, 1.442695
  %v1667 = vpow.pop %v1666
  %v1668 = vadd.f32 %v1667, 1.0
  %v1669 = vrcp.pop %v1668
  %v1670 = vmul.f32 1.0, %v1669
  %1672 = vrot.lane.b32.xlu0 %v1664, 64
  %v1673 = vpop.permute.xlu0 %1672
  %v1674 = vrot.slane %v1673, 2
  %v1676 = vtanh.pop %v1674
  %v1677 = vmul.f32 %v1670, %v1568
  %v1678 = vmul.f32 %v1670, %v1676
  %1680 = vrot.lane.b32.xlu0 %v1678, 64
  %v1681 = vpop.permute.xlu0 %1680
  %v1683 = vadd.f32 %v1677, %v1681
  %v1684 = vtanh.pop %v1683
  %v1686 = vrot.slane %v1670, 2
  %1689 = vrot.lane.b32.xlu0 %v1684, 64
  %v1690 = vpop.permute.xlu0 %1689
  %v1692 = vmul.f32 %v1686, %v1690
  %v1693 = vld [vmem:[%s4] sm:$0xff]
  %v1694 = vld [vmem:[%s4 + $0x8] sm:$0xff]
  %v1695 = vld [vmem:[%s4 + $0x10] sm:$0xff]
  %v1696 = vld [vmem:[%s4 + $0x18] sm:$0xff]
  %v1697 = vld [vmem:[%s4 + $0x20] sm:$0xff]
  %v1698 = vld [vmem:[%s4 + $0x28] sm:$0xff]
  %v1699 = vld [vmem:[%s4 + $0x30] sm:$0xff]
  %v1700 = vld [vmem:[%s4 + $0x38] sm:$0xff]
  %v1701 = vld [vmem:[#allocation3] sm:$0x1]
  %v1703 = vlaneseq
  %v1704 = vshrl.u32 %v1703, 7
  %v1705 = vsub.s32 0, %v1704
  %v1706 = vrot.slane %v1701, %v1705
  %v1709 = vsel %vm773, %v1692, 0
  %1711 = vmatprep.subr.mxu0 0.0
  %1712 = vmatpush1.msra.mxu0 %v1693
  %1713 = vmatprep.subr.mxu0 0.0
  %1714 = vmatpush1.msra.mxu0 %v1694
  %1715 = vmatprep.subr.mxu0 0.0
  %1716 = vmatpush1.msra.mxu0 %v1695
  %1717 = vmatprep.subr.mxu0 0.0
  %1718 = vmatpush1.msra.mxu0 %v1696
  %1719 = vmatprep.subr.mxu0 0.0
  %1720 = vmatpush1.msra.mxu0 %v1697
  %1721 = vmatprep.subr.mxu0 0.0
  %1722 = vmatpush1.msra.mxu0 %v1698
  %1723 = vmatprep.subr.mxu0 0.0
  %1724 = vmatpush1.msra.mxu0 %v1699
  %1725 = vmatprep.subr.mxu0 0.0
  %1726 = vmatpush1.msra.mxu0 %v1700
  %1727 = vmatprep.subr.mxu0 0.0
  %1728 = vmatpush1.msra.mxu0 0.0
  %1729 = vmatprep.subr.mxu0 0.0
  %1730 = vmatpush1.msra.mxu0 0.0
  %1731 = vmatprep.subr.mxu0 0.0
  %1732 = vmatpush1.msra.mxu0 0.0
  %1733 = vmatprep.subr.mxu0 0.0
  %1734 = vmatpush1.msra.mxu0 0.0
  %1735 = vmatprep.subr.mxu0 0.0
  %1736 = vmatpush1.msra.mxu0 0.0
  %1737 = vmatprep.subr.mxu0 0.0
  %1738 = vmatpush1.msra.mxu0 0.0
  %1739 = vmatprep.subr.mxu0 0.0
  %1740 = vmatpush1.msra.mxu0 0.0
  %1741 = vmatprep.subr.mxu0 0.0
  %1742 = vmatpush1.msra.mxu0 0.0
  %1743 = vmatprep.subr.mxu0 0.0
  %1744 = vmatpush1.msra.mxu0 0.0
  %1745 = vmatprep.subr.mxu0 0.0
  %1746 = vmatpush1.msra.mxu0 0.0
  %1747 = vmatprep.subr.mxu0 0.0
  %1748 = vmatpush1.msra.mxu0 0.0
  %1749 = vmatprep.subr.mxu0 0.0
  %1750 = vmatpush1.msra.mxu0 0.0
  %1751 = vmatprep.subr.mxu0 0.0
  %1752 = vmatpush1.msra.mxu0 0.0
  %1753 = vmatprep.subr.mxu0 0.0
  %1754 = vmatpush1.msra.mxu0 0.0
  %1755 = vmatprep.subr.mxu0 0.0
  %1756 = vmatpush1.msra.mxu0 0.0
  %1757 = vmatprep.subr.mxu0 0.0
  %1758 = vmatpush1.msra.mxu0 0.0
  %1759 = vmatprep.subr.mxu0 0.0
  %1760 = vmatpush1.msra.mxu0 0.0
  %1761 = vmatprep.subr.mxu0 0.0
  %1762 = vmatpush1.msra.mxu0 0.0
  %1763 = vmatprep.subr.mxu0 0.0
  %1764 = vmatpush1.msra.mxu0 0.0
  %1765 = vmatprep.subr.mxu0 0.0
  %1766 = vmatpush1.msra.mxu0 0.0
  %1767 = vmatprep.subr.mxu0 0.0
  %1768 = vmatpush1.msra.mxu0 0.0
  %1769 = vmatprep.subr.mxu0 0.0
  %1770 = vmatpush1.msra.mxu0 0.0
  %1771 = vmatprep.subr.mxu0 0.0
  %1772 = vmatpush1.msra.mxu0 0.0
  %1773 = vmatprep.subr.mxu0 0.0
  %1774 = vmatpush1.msra.mxu0 0.0
  %1775 = vmatprep.mubr.f32.mxu0 0.0
  %1776 = vmatmul.mubr.f32.gmra.mrb[0].mxu0 %v1709
  %v1777 = vpop.f32.mrb[0].mxu0
  %v1778 = vadd.f32 %v1706, %v1777
  %v1779 = vpop.f32.mrb[0].mxu0
  %1780 = vdwg.mxu0
  %v1781 = vxor.u32 %v1778, 2147483648
  %v1782 = vmul.f32 %v1781, 1.442695
  %v1783 = vpow.pop %v1782
  %v1784 = vadd.f32 %v1783, 1.0
  %v1785 = vrcp.pop %v1784
  %v1786 = vmul.f32 1.0, %v1785
  %vm1787 = vcmask 1024
  %1788 = vst.msk [vmem:[%s6] sm:$0x3] %vm1787, %v1786
  // Predicated region
  $region26: #{simple_lstm_forward.1} parent=0 // pred_check
    _
  $region27: #{simple_lstm_forward.1} parent=0 // pred_check_branch
    %1790 = sbr.rel (0) target = $region29
  $region28: #{simple_lstm_forward.1} parent=0 // pred_region
    _
  $region29: #{simple_lstm_forward.1} parent=0 // pred_fallthru
    _
  // Predicated region
  $region30: #{simple_lstm_forward.1} parent=0 // pred_check
    _
  $region31: #{simple_lstm_forward.1} parent=0 // pred_check_branch
    %1792 = sbr.rel (0) target = $region33
  $region32: #{simple_lstm_forward.1} parent=0 // pred_region
    _
  $region33: #{simple_lstm_forward.1} parent=0 // pred_fallthru
    _

</llo_original>
